<compile_context>
chip_gen: v7x
topology: tpu7x:2x2x1
jax: 0.10.0
libtpu: 0.0.40
codegen_flags: <defaults>
</compile_context>

<pallas_src>
import math

import jax
import jax.numpy as jnp
from jax.experimental import pallas as pl
from jax.experimental.pallas import tpu as pltpu


def _ffn_kernel(x_ref, w1_ref, b1_ref, w2_ref, b2_ref, o_ref, acc_ref):
    """One (row-tile, d_ff-tile) step of  relu(x @ W1 + b1) @ W2 + b2."""
    f = pl.program_id(1)

    @pl.when(f == 0)
    def _():
        acc_ref[...] = jnp.zeros_like(acc_ref)

    # h_f = relu(x @ W1[:, f_tile] + b1[f_tile])   -> (tm, tf), f32 accumulate
    h = jnp.dot(x_ref[...], w1_ref[...],
                preferred_element_type=jnp.float32,
                precision=jax.lax.Precision.HIGHEST)
    h = jnp.maximum(h + b1_ref[...].astype(jnp.float32), 0.0)

    # TODO(synk): dropout is the identity here (eval-mode forward); a
    # training-mode dropout would need pltpu.prng_* and cannot reproduce
    # torch's RNG stream anyway.

    # acc += h_f @ W2[f_tile, :]                   -> (tm, d_model), f32
    acc_ref[...] += jnp.dot(h.astype(w2_ref.dtype), w2_ref[...],
                            preferred_element_type=jnp.float32,
                            precision=jax.lax.Precision.HIGHEST)

    @pl.when(f == pl.num_programs(1) - 1)
    def _():
        o_ref[...] = (acc_ref[...]
                      + b2_ref[...].astype(jnp.float32)).astype(o_ref.dtype)


def _pick_ff_tile(d_ff, target):
    """Largest 128-multiple <= target that divides d_ff, else the full d_ff."""
    if d_ff <= target or d_ff % 128 != 0:
        return d_ff
    t = (min(target, d_ff) // 128) * 128
    while t >= 128:
        if d_ff % t == 0:
            return t
        t -= 128
    return d_ff


def positionwise_feed_forward(x, w1, b1, w2, b2, *, row_tile=256, ff_tile=512):
    """FFN forward: relu(x @ w1 + b1) @ w2 + b2.

    x:  (..., d_model)
    w1: (d_model, d_ff)   == torch w_1.weight.T
    b1: (d_ff,)           == torch w_1.bias
    w2: (d_ff, d_model)   == torch w_2.weight.T
    b2: (d_model,)        == torch w_2.bias
    """
    orig_shape = x.shape
    d_model = orig_shape[-1]
    d_ff = w1.shape[1]
    rows = math.prod(orig_shape[:-1]) if len(orig_shape) > 1 else 1

    x2 = x.reshape(rows, d_model)
    b1_2 = b1.reshape(1, d_ff)
    b2_2 = b2.reshape(1, d_model)

    # Row tile: large multiple of 8, or the whole (small) row count.  No
    # host-side padding — Pallas masks the ragged final block (grid uses cdiv).
    tm = rows if rows <= row_tile else row_tile
    tf = _pick_ff_tile(d_ff, ff_tile)

    grid = (pl.cdiv(rows, tm), d_ff // tf)

    # VMEM budget estimate (double-buffered blocks + accumulator) with headroom.
    isz = jnp.dtype(x.dtype).itemsize
    blk_bytes = (
        tm * d_model * isz                         # x tile
        + d_model * tf * jnp.dtype(w1.dtype).itemsize
        + tf * d_model * jnp.dtype(w2.dtype).itemsize
        + tf * jnp.dtype(b1.dtype).itemsize
        + d_model * jnp.dtype(b2.dtype).itemsize
        + tm * d_model * isz                       # out tile
    )
    vmem_needed = 2 * blk_bytes + tm * d_model * 4 + (2 << 20)
    vmem_limit = int(min(max(vmem_needed, 32 << 20), 56 << 20))

    out = pl.pallas_call(
        _ffn_kernel,
        out_shape=jax.ShapeDtypeStruct((rows, d_model), x.dtype),
        grid_spec=pltpu.PrefetchScalarGridSpec(
            num_scalar_prefetch=0,
            grid=grid,
            in_specs=[
                pl.BlockSpec((tm, d_model), lambda i, f: (i, 0)),   # x
                pl.BlockSpec((d_model, tf), lambda i, f: (0, f)),   # w1
                pl.BlockSpec((1, tf), lambda i, f: (0, f)),         # b1
                pl.BlockSpec((tf, d_model), lambda i, f: (f, 0)),   # w2
                pl.BlockSpec((1, d_model), lambda i, f: (0, 0)),    # b2
            ],
            out_specs=pl.BlockSpec((tm, d_model), lambda i, f: (i, 0)),
            scratch_shapes=[pltpu.VMEM((tm, d_model), jnp.float32)],
        ),
        compiler_params=pltpu.CompilerParams(
            dimension_semantics=("parallel", "arbitrary"),
            vmem_limit_bytes=vmem_limit,
        ),
    )(x2, w1, b1_2, w2, b2_2)

    return out.reshape(orig_shape)


if __name__ == "__main__":
    # Small shapes consistent with the module; lane-dense (multiples of 128).
    batch, seq = 2, 8
    d_model, d_ff = 128, 256

    key = jax.random.PRNGKey(0)
    kx, kw1, kb1, kw2, kb2 = jax.random.split(key, 5)
    x = jax.random.normal(kx, (batch, seq, d_model), dtype=jnp.float32)
    # Parameters stored as (in, out), i.e. the transpose of torch Linear.weight.
    w1 = jax.random.normal(kw1, (d_model, d_ff), dtype=jnp.float32) * 0.05
    b1 = jax.random.normal(kb1, (d_ff,), dtype=jnp.float32) * 0.05
    w2 = jax.random.normal(kw2, (d_ff, d_model), dtype=jnp.float32) * 0.05
    b2 = jax.random.normal(kb2, (d_model,), dtype=jnp.float32) * 0.05

    out = positionwise_feed_forward(x, w1, b1, w2, b2)
    jax.block_until_ready(out)

    # Reference: w_2(dropout(relu(w_1(x)))) with dropout in eval mode.
    h = jnp.maximum(
        jnp.dot(x, w1, precision=jax.lax.Precision.HIGHEST) + b1, 0.0)
    ref = jnp.dot(h, w2, precision=jax.lax.Precision.HIGHEST) + b2

    assert out.shape == x.shape
    assert jnp.allclose(out, ref, atol=2e-3, rtol=2e-3), "mismatch vs reference"
    print("KERNEL_OK")
</pallas_src>

<mosaic_0001>
module attributes {stable_mosaic.version = 11 : i64} {
  func.func @_ffn_kernel(%arg0: i32, %arg1: i32, %arg2: memref<16x128xf32, #tpu.memory_space<vmem>>, %arg3: memref<128x256xf32, #tpu.memory_space<vmem>>, %arg4: memref<1x256xf32, #tpu.memory_space<vmem>>, %arg5: memref<256x128xf32, #tpu.memory_space<vmem>>, %arg6: memref<1x128xf32, #tpu.memory_space<vmem>>, %arg7: memref<16x128xf32, #tpu.memory_space<vmem>>, %arg8: memref<16x128xf32, #tpu.memory_space<vmem>>) attributes {dimension_semantics = [#tpu.dimension_semantics<parallel>, #tpu.dimension_semantics<arbitrary>], iteration_bounds = array<i64: 1, 1>, scalar_prefetch = 0 : i64, scratch_operands = 1 : i64, tpu.core_type = #tpu.core_type<tc>, window_params = [{transform_indices = @transform_0, window_bounds = array<i64: 16, 128>}, {transform_indices = @transform_1, window_bounds = array<i64: 128, 256>}, {transform_indices = @transform_2, window_bounds = array<i64: 1, 256>}, {transform_indices = @transform_3, window_bounds = array<i64: 256, 128>}, {pipeline_mode = #tpu.pipeline_mode<synchronous>, transform_indices = @transform_4, window_bounds = array<i64: 1, 128>}, {transform_indices = @transform_5, window_bounds = array<i64: 16, 128>}]} {
    %c0_i32 = arith.constant 0 : i32
    %0 = arith.cmpi eq, %arg1, %c0_i32 : i32
    %1 = arith.extui %0 : i1 to i32
    %c0_i32_0 = arith.constant 0 : i32
    %2 = arith.cmpi ne, %1, %c0_i32_0 : i32
    scf.if %2 {
      %cst_16 = arith.constant 0.000000e+00 : f32
      %19 = vector.broadcast %cst_16 : f32 to vector<16x128xf32>
      %c0_17 = arith.constant 0 : index
      %c0_18 = arith.constant 0 : index
      %20 = vector.load %arg8[%c0_17, %c0_18] : memref<16x128xf32, #tpu.memory_space<vmem>>, vector<16x128xf32>
      tpu.vector_store %arg8[%c0_17, %c0_18], %19 {strides = array<i32>} : memref<16x128xf32, #tpu.memory_space<vmem>>, vector<16x128xf32>,
    } else {
    }
    %c0 = arith.constant 0 : index
    %c0_1 = arith.constant 0 : index
    %3 = vector.load %arg2[%c0, %c0_1] : memref<16x128xf32, #tpu.memory_space<vmem>>, vector<16x128xf32>
    %c0_2 = arith.constant 0 : index
    %c0_3 = arith.constant 0 : index
    %4 = vector.load %arg3[%c0_2, %c0_3] : memref<128x256xf32, #tpu.memory_space<vmem>>, vector<128x256xf32>
    %cst = arith.constant dense<0.000000e+00> : vector<16x256xf32>
    %5 = tpu.matmul %3, %4, %cst {dimension_numbers = #tpu.dot_dimension_numbers<[1], [0], [0], [1], [0, 0, 1, 1], [], []>, precision = #tpu.contract_precision<fp32>} : vector<16x128xf32>, vector<128x256xf32>, vector<16x256xf32> -> vector<16x256xf32>
    %c0_4 = arith.constant 0 : index
    %c0_5 = arith.constant 0 : index
    %6 = vector.load %arg4[%c0_4, %c0_5] : memref<1x256xf32, #tpu.memory_space<vmem>>, vector<1x256xf32>
    %7 = vector.broadcast %6 : vector<1x256xf32> to vector<16x256xf32>
    %8 = arith.addf %5, %7 : vector<16x256xf32>
    %cst_6 = arith.constant 0.000000e+00 : f32
    %9 = vector.broadcast %cst_6 : f32 to vector<16x256xf32>
    %10 = arith.maximumf %8, %9 : vector<16x256xf32>
    %c0_7 = arith.constant 0 : index
    %c0_8 = arith.constant 0 : index
    %11 = vector.load %arg8[%c0_7, %c0_8] : memref<16x128xf32, #tpu.memory_space<vmem>>, vector<16x128xf32>
    %c0_9 = arith.constant 0 : index
    %c0_10 = arith.constant 0 : index
    %12 = vector.load %arg5[%c0_9, %c0_10] : memref<256x128xf32, #tpu.memory_space<vmem>>, vector<256x128xf32>
    %cst_11 = arith.constant dense<0.000000e+00> : vector<16x128xf32>
    %13 = tpu.matmul %10, %12, %cst_11 {dimension_numbers = #tpu.dot_dimension_numbers<[1], [0], [0], [1], [0, 0, 1, 1], [], []>, precision = #tpu.contract_precision<fp32>} : vector<16x256xf32>, vector<256x128xf32>, vector<16x128xf32> -> vector<16x128xf32>
    %14 = arith.addf %11, %13 : vector<16x128xf32>
    %c0_12 = arith.constant 0 : index
    %c0_13 = arith.constant 0 : index
    %15 = vector.load %arg8[%c0_12, %c0_13] : memref<16x128xf32, #tpu.memory_space<vmem>>, vector<16x128xf32>
    tpu.vector_store %arg8[%c0_12, %c0_13], %14 {strides = array<i32>} : memref<16x128xf32, #tpu.memory_space<vmem>>, vector<16x128xf32>,
    %c0_i32_14 = arith.constant 0 : i32
    %16 = arith.cmpi eq, %arg1, %c0_i32_14 : i32
    %17 = arith.extui %16 : i1 to i32
    %c0_i32_15 = arith.constant 0 : i32
    %18 = arith.cmpi ne, %17, %c0_i32_15 : i32
    scf.if %18 {
      %c0_16 = arith.constant 0 : index
      %c0_17 = arith.constant 0 : index
      %19 = vector.load %arg8[%c0_16, %c0_17] : memref<16x128xf32, #tpu.memory_space<vmem>>, vector<16x128xf32>
      %c0_18 = arith.constant 0 : index
      %c0_19 = arith.constant 0 : index
      %20 = vector.load %arg6[%c0_18, %c0_19] : memref<1x128xf32, #tpu.memory_space<vmem>>, vector<1x128xf32>
      %21 = vector.broadcast %20 : vector<1x128xf32> to vector<16x128xf32>
      %22 = arith.addf %19, %21 : vector<16x128xf32>
      %c0_20 = arith.constant 0 : index
      %c0_21 = arith.constant 0 : index
      %23 = vector.load %arg7[%c0_20, %c0_21] : memref<16x128xf32, #tpu.memory_space<vmem>>, vector<16x128xf32>
      tpu.vector_store %arg7[%c0_20, %c0_21], %22 {strides = array<i32>} : memref<16x128xf32, #tpu.memory_space<vmem>>, vector<16x128xf32>,
    } else {
    }
    return
  }
  func.func @transform_0(%arg0: i32, %arg1: i32) -> (i32, i32) {
    %c0_i32 = arith.constant 0 : i32
    %c0_i32_0 = arith.constant 0 : i32
    return %arg0, %c0_i32 : i32, i32
  }
  func.func @transform_1(%arg0: i32, %arg1: i32) -> (i32, i32) {
    %c0_i32 = arith.constant 0 : i32
    %c0_i32_0 = arith.constant 0 : i32
    return %c0_i32, %arg1 : i32, i32
  }
  func.func @transform_2(%arg0: i32, %arg1: i32) -> (i32, i32) {
    %c0_i32 = arith.constant 0 : i32
    %c0_i32_0 = arith.constant 0 : i32
    return %c0_i32, %arg1 : i32, i32
  }
  func.func @transform_3(%arg0: i32, %arg1: i32) -> (i32, i32) {
    %c0_i32 = arith.constant 0 : i32
    %c0_i32_0 = arith.constant 0 : i32
    return %arg1, %c0_i32 : i32, i32
  }
  func.func @transform_4(%arg0: i32, %arg1: i32) -> (i32, i32) {
    %c0_i32 = arith.constant 0 : i32
    %c0_i32_0 = arith.constant 0 : i32
    %c0_i32_1 = arith.constant 0 : i32
    return %c0_i32, %c0_i32_0 : i32, i32
  }
  func.func @transform_5(%arg0: i32, %arg1: i32) -> (i32, i32) {
    %c0_i32 = arith.constant 0 : i32
    %c0_i32_0 = arith.constant 0 : i32
    return %arg0, %c0_i32 : i32, i32
  }
}

</mosaic_0001>

<llo_original>
// kernel: tpu_custom_call.1
$region0: #{tpu_custom_call.1}
  #allocation0 [shape = 'u32[]', space=smem, size = 0x4, offset = 0x4, fixed_abs, tag = 'smem constant byte address 0x4 - core index']
  #allocation1 [shape = 'u32[144,128]{1,0:T(1,128)}', space=vmem, size = 0x12000, scoped, tag = 'internal scratch']
  #allocation2 [shape = 'f32[16,128]{1,0:T(8,128)}', space=vmem, size = 0x2000, scoped, tag = 'scratch operand']
  %s0 = inlined_call_operand.hbm [shape: f32[16,128], index: 0, kind: input, shape index: {}]
  %s1 = inlined_call_operand.hbm [shape: f32[128,256], index: 1, kind: input, shape index: {}]
  %s2 = inlined_call_operand.vmem [shape: f32[1,256], index: 2, kind: input, shape index: {}]
  %s3 = inlined_call_operand.hbm [shape: f32[256,128], index: 3, kind: input, shape index: {}]
  %s4 = inlined_call_operand.vmem [shape: f32[1,128], index: 4, kind: input, shape index: {}]
  %s5 = inlined_call_operand.hbm [shape: f32[16,128], index: 5, kind: output, shape index: {}]
  %s6 = sld [smem:[#allocation0]]
  $region50: #{tpu_custom_call.1} parent=0
    _
  %s8 = ssub.s32 1, %s6
  %s9 = scalar_select 0, %s8, %s6
  $region1: #{tpu_custom_call.1} parent=0
    #allocation3 [shape = 'u8[8192]{0}', space=vmem, size = 0x2000, scoped, tag = 'input window, operand 0, single buffered']
    #allocation4 [shape = 's32[1]{0}', space=sflag, size = 0x4, scoped, tag = 'scoped memory for tpu_custom_call.1']
    #allocation5 [shape = 's32[1]{0}', space=sflag, size = 0x4, scoped, tag = 'scoped memory for tpu_custom_call.1']
    #allocation6 [shape = 'u8[131072]{0}', space=vmem, size = 0x20000, scoped, tag = 'input window, operand 1, single buffered']
    #allocation7 [shape = 's32[1]{0}', space=sflag, size = 0x4, scoped, tag = 'scoped memory for tpu_custom_call.1']
    #allocation8 [shape = 'u8[131072]{0}', space=vmem, size = 0x20000, scoped, tag = 'input window, operand 3, single buffered']
    #allocation9 [shape = 'u8[8192]{0}', space=vmem, size = 0x2000, scoped, tag = 'output window, operand 0, single buffered']
    %10 = vsyncpa [#allocation4], 0
    %11 = vsyncpa [#allocation7], 0
    %12 = vsyncpa [#allocation5], 0
    // Predicated region
    $region2: #{tpu_custom_call.1} parent=1 // pred_check
      _
    $region3: #{tpu_custom_call.1} parent=1 // pred_check_branch
      %14 = sbr.rel (0) target = $region5
    $region4: #{tpu_custom_call.1} parent=1 // pred_region
      %s16 = ssub.s32 256, 256
      %17 = vsyncadd [#allocation4], %s16
      %s18 = sshll.u32 [#allocation3], 4
      %s19 = int_to_ptr.vmem [resolvable:$true] %s18
      %24 = dma.hbm_to_vmem [thread:$0]  %s0, 256, %s19, [#allocation4], 128, 128, 8
    $region5: #{tpu_custom_call.1} parent=1 // pred_fallthru
      _
    // Predicated region
    $region6: #{tpu_custom_call.1} parent=1 // pred_check
      _
    $region7: #{tpu_custom_call.1} parent=1 // pred_check_branch
      %26 = sbr.rel (0) target = $region9
    $region8: #{tpu_custom_call.1} parent=1 // pred_region
      %s28 = ssub.s32 4096, 4096
      %29 = vsyncadd [#allocation7], %s28
      %s30 = sshll.u32 [#allocation6], 4
      %s31 = int_to_ptr.vmem [resolvable:$true] %s30
      %36 = dma.hbm_to_vmem [thread:$0]  %s1, 4096, %s31, [#allocation7], 256, 256, 16
    $region9: #{tpu_custom_call.1} parent=1 // pred_fallthru
      _
    // Predicated region
    $region10: #{tpu_custom_call.1} parent=1 // pred_check
      _
    $region11: #{tpu_custom_call.1} parent=1 // pred_check_branch
      %38 = sbr.rel (0) target = $region13
    $region12: #{tpu_custom_call.1} parent=1 // pred_region
      _
    $region13: #{tpu_custom_call.1} parent=1 // pred_fallthru
      _
    // Predicated region
    $region14: #{tpu_custom_call.1} parent=1 // pred_check
      _
    $region15: #{tpu_custom_call.1} parent=1 // pred_check_branch
      %40 = sbr.rel (0) target = $region17
    $region16: #{tpu_custom_call.1} parent=1 // pred_region
      %s42 = ssub.s32 4096, 4096
      %43 = vsyncadd [#allocation7], %s42
      %s44 = sshll.u32 [#allocation8], 4
      %s45 = int_to_ptr.vmem [resolvable:$true] %s44
      %50 = dma.hbm_to_vmem [thread:$0]  %s3, 4096, %s45, [#allocation7], 128, 128, 8
    $region17: #{tpu_custom_call.1} parent=1 // pred_fallthru
      _
    // Predicated region
    $region18: #{tpu_custom_call.1} parent=1 // pred_check
      _
    $region19: #{tpu_custom_call.1} parent=1 // pred_check_branch
      %52 = sbr.rel (0) target = $region21
    $region20: #{tpu_custom_call.1} parent=1 // pred_region
      _
    $region21: #{tpu_custom_call.1} parent=1 // pred_fallthru
      _
    // Predicated region
    $region22: #{tpu_custom_call.1} parent=1 // pred_check
      _
    $region23: #{tpu_custom_call.1} parent=1 // pred_check_branch
      %54 = sbr.rel (0) target = $region25
    $region24: #{tpu_custom_call.1} parent=1 // pred_region
      %55 = dma.done [#allocation4], 256
    $region25: #{tpu_custom_call.1} parent=1 // pred_fallthru
      _
    // Predicated region
    $region26: #{tpu_custom_call.1} parent=1 // pred_check
      _
    $region27: #{tpu_custom_call.1} parent=1 // pred_check_branch
      %57 = sbr.rel (0) target = $region29
    $region28: #{tpu_custom_call.1} parent=1 // pred_region
      %58 = dma.done [#allocation7], 4096
    $region29: #{tpu_custom_call.1} parent=1 // pred_fallthru
      _
    // Predicated region
    $region30: #{tpu_custom_call.1} parent=1 // pred_check
      _
    $region31: #{tpu_custom_call.1} parent=1 // pred_check_branch
      %60 = sbr.rel (0) target = $region33
    $region32: #{tpu_custom_call.1} parent=1 // pred_region
      %61 = dma.done [#allocation7], 4096
    $region33: #{tpu_custom_call.1} parent=1 // pred_fallthru
      _
    %p62 = scmp.eq.s32.totalorder 0, 0
    // Predicated region
    $region34: #{tpu_custom_call.1} parent=1 // pred_check
      %p63 = pneg %p62
    $region35: #{tpu_custom_call.1} parent=1 // pred_check_branch
      %65 = sbr.rel (%p63) target = $region37
    $region36: #{tpu_custom_call.1} parent=1 // pred_region
      %66 = vst [vmem:[#allocation2] sm:$0xff] 0.0
      %67 = vst [vmem:[#allocation2 + $0x8] sm:$0xff] 0.0
    $region37: #{tpu_custom_call.1} parent=1 // pred_fallthru
      _
    %v68 = vld [vmem:[#allocation3] sm:$0xff]
    %v69 = vld [vmem:[#allocation3 + $0x8] sm:$0xff]
    %v70 = vld [vmem:[#allocation6] sm:$0xff]
    %v71 = vld [vmem:[#allocation6 + $0x8] sm:$0xff]
    %v72 = vld [vmem:[#allocation6 + $0x10] sm:$0xff]
    %v73 = vld [vmem:[#allocation6 + $0x18] sm:$0xff]
    %v74 = vld [vmem:[#allocation6 + $0x20] sm:$0xff]
    %v75 = vld [vmem:[#allocation6 + $0x28] sm:$0xff]
    %v76 = vld [vmem:[#allocation6 + $0x30] sm:$0xff]
    %v77 = vld [vmem:[#allocation6 + $0x38] sm:$0xff]
    %v78 = vld [vmem:[#allocation6 + $0x40] sm:$0xff]
    %v79 = vld [vmem:[#allocation6 + $0x48] sm:$0xff]
    %v80 = vld [vmem:[#allocation6 + $0x50] sm:$0xff]
    %v81 = vld [vmem:[#allocation6 + $0x58] sm:$0xff]
    %v82 = vld [vmem:[#allocation6 + $0x60] sm:$0xff]
    %v83 = vld [vmem:[#allocation6 + $0x68] sm:$0xff]
    %v84 = vld [vmem:[#allocation6 + $0x70] sm:$0xff]
    %v85 = vld [vmem:[#allocation6 + $0x78] sm:$0xff]
    %v86 = vld [vmem:[#allocation6 + $0x80] sm:$0xff]
    %v87 = vld [vmem:[#allocation6 + $0x88] sm:$0xff]
    %v88 = vld [vmem:[#allocation6 + $0x90] sm:$0xff]
    %v89 = vld [vmem:[#allocation6 + $0x98] sm:$0xff]
    %v90 = vld [vmem:[#allocation6 + $0xa0] sm:$0xff]
    %v91 = vld [vmem:[#allocation6 + $0xa8] sm:$0xff]
    %v92 = vld [vmem:[#allocation6 + $0xb0] sm:$0xff]
    %v93 = vld [vmem:[#allocation6 + $0xb8] sm:$0xff]
    %v94 = vld [vmem:[#allocation6 + $0xc0] sm:$0xff]
    %v95 = vld [vmem:[#allocation6 + $0xc8] sm:$0xff]
    %v96 = vld [vmem:[#allocation6 + $0xd0] sm:$0xff]
    %v97 = vld [vmem:[#allocation6 + $0xd8] sm:$0xff]
    %v98 = vld [vmem:[#allocation6 + $0xe0] sm:$0xff]
    %v99 = vld [vmem:[#allocation6 + $0xe8] sm:$0xff]
    %v100 = vld [vmem:[#allocation6 + $0xf0] sm:$0xff]
    %v101 = vld [vmem:[#allocation6 + $0xf8] sm:$0xff]
    %v102 = vld [vmem:[%s2] sm:$0x3]
    %v104 = vlaneseq
    %v105 = vshrl.u32 %v104, 7
    %v106 = vsub.s32 0, %v105
    %v107 = vrot.slane %v102, %v106
    %v108 = vlaneseq
    %v109 = vshrl.u32 %v108, 7
    %v110 = vsub.s32 1, %v109
    %v111 = vrot.slane %v102, %v110
    %v114 = vand.u32 %v71, 4294901760
    %115 = vmatprep.subr.mxu0 %v114
    %v116 = vand.u32 %v70, 4294901760
    %117 = vmatpush1.msra.mxu0 %v116
    %v118 = vand.u32 %v73, 4294901760
    %119 = vmatprep.subr.mxu0 %v118
    %v120 = vand.u32 %v72, 4294901760
    %121 = vmatpush1.msra.mxu0 %v120
    %v122 = vand.u32 %v75, 4294901760
    %123 = vmatprep.subr.mxu0 %v122
    %v124 = vand.u32 %v74, 4294901760
    %125 = vmatpush1.msra.mxu0 %v124
    %v126 = vand.u32 %v77, 4294901760
    %127 = vmatprep.subr.mxu0 %v126
    %v128 = vand.u32 %v76, 4294901760
    %129 = vmatpush1.msra.mxu0 %v128
    %v130 = vand.u32 %v79, 4294901760
    %131 = vmatprep.subr.mxu0 %v130
    %v132 = vand.u32 %v78, 4294901760
    %133 = vmatpush1.msra.mxu0 %v132
    %v134 = vand.u32 %v81, 4294901760
    %135 = vmatprep.subr.mxu0 %v134
    %v136 = vand.u32 %v80, 4294901760
    %137 = vmatpush1.msra.mxu0 %v136
    %v138 = vand.u32 %v83, 4294901760
    %139 = vmatprep.subr.mxu0 %v138
    %v140 = vand.u32 %v82, 4294901760
    %141 = vmatpush1.msra.mxu0 %v140
    %v142 = vand.u32 %v85, 4294901760
    %143 = vmatprep.subr.mxu0 %v142
    %v144 = vand.u32 %v84, 4294901760
    %145 = vmatpush1.msra.mxu0 %v144
    %v146 = vand.u32 %v87, 4294901760
    %147 = vmatprep.subr.mxu0 %v146
    %v148 = vand.u32 %v86, 4294901760
    %149 = vmatpush1.msra.mxu0 %v148
    %v150 = vand.u32 %v89, 4294901760
    %151 = vmatprep.subr.mxu0 %v150
    %v152 = vand.u32 %v88, 4294901760
    %153 = vmatpush1.msra.mxu0 %v152
    %v154 = vand.u32 %v91, 4294901760
    %155 = vmatprep.subr.mxu0 %v154
    %v156 = vand.u32 %v90, 4294901760
    %157 = vmatpush1.msra.mxu0 %v156
    %v158 = vand.u32 %v93, 4294901760
    %159 = vmatprep.subr.mxu0 %v158
    %v160 = vand.u32 %v92, 4294901760
    %161 = vmatpush1.msra.mxu0 %v160
    %v162 = vand.u32 %v95, 4294901760
    %163 = vmatprep.subr.mxu0 %v162
    %v164 = vand.u32 %v94, 4294901760
    %165 = vmatpush1.msra.mxu0 %v164
    %v166 = vand.u32 %v97, 4294901760
    %167 = vmatprep.subr.mxu0 %v166
    %v168 = vand.u32 %v96, 4294901760
    %169 = vmatpush1.msra.mxu0 %v168
    %v170 = vand.u32 %v99, 4294901760
    %171 = vmatprep.subr.mxu0 %v170
    %v172 = vand.u32 %v98, 4294901760
    %173 = vmatpush1.msra.mxu0 %v172
    %v174 = vand.u32 %v101, 4294901760
    %175 = vmatprep.subr.mxu0 %v174
    %v176 = vand.u32 %v100, 4294901760
    %177 = vmatpush1.msra.mxu0 %v176
    %178 = vmatprep.subr.mxu0 0.0
    %179 = vmatpush1.msra.mxu0 0.0
    %180 = vmatprep.subr.mxu0 0.0
    %181 = vmatpush1.msra.mxu0 0.0
    %182 = vmatprep.subr.mxu0 0.0
    %183 = vmatpush1.msra.mxu0 0.0
    %184 = vmatprep.subr.mxu0 0.0
    %185 = vmatpush1.msra.mxu0 0.0
    %186 = vmatprep.subr.mxu0 0.0
    %187 = vmatpush1.msra.mxu0 0.0
    %188 = vmatprep.subr.mxu0 0.0
    %189 = vmatpush1.msra.mxu0 0.0
    %190 = vmatprep.subr.mxu0 0.0
    %191 = vmatpush1.msra.mxu0 0.0
    %192 = vmatprep.subr.mxu0 0.0
    %193 = vmatpush1.msra.mxu0 0.0
    %194 = vmatprep.subr.mxu0 0.0
    %195 = vmatpush1.msra.mxu0 0.0
    %196 = vmatprep.subr.mxu0 0.0
    %197 = vmatpush1.msra.mxu0 0.0
    %198 = vmatprep.subr.mxu0 0.0
    %199 = vmatpush1.msra.mxu0 0.0
    %200 = vmatprep.subr.mxu0 0.0
    %201 = vmatpush1.msra.mxu0 0.0
    %202 = vmatprep.subr.mxu0 0.0
    %203 = vmatpush1.msra.mxu0 0.0
    %204 = vmatprep.subr.mxu0 0.0
    %205 = vmatpush1.msra.mxu0 0.0
    %206 = vmatprep.subr.mxu0 0.0
    %207 = vmatpush1.msra.mxu0 0.0
    %208 = vmatprep.subr.mxu0 0.0
    %209 = vmatpush1.msra.mxu0 0.0
    %210 = vmatprep.mubr.f32.mxu0 0.0
    %v211 = vand.u32 %v68, 4294901760
    %v212 = vsub.f32 %v68, %v211
    %v213 = vand.u32 %v212, 4294901760
    %v214 = vsub.f32 %v212, %v213
    %v215 = vand.u32 %v214, 4294901760
    %216 = vmatmul.mubr.f32.gmra.mrb[0].mxu0 %v215
    %v217 = vpop.f32.mrb[0].mxu0
    %v218 = vadd.f32 %v107, %v217
    %v219 = vpop.f32.mrb[0].mxu0
    %v220 = vadd.f32 %v111, %v219
    %221 = vmatprep.mubr.f32.mxu0 0.0
    %v222 = vand.u32 %v69, 4294901760
    %v223 = vsub.f32 %v69, %v222
    %v224 = vand.u32 %v223, 4294901760
    %v225 = vsub.f32 %v223, %v224
    %v226 = vand.u32 %v225, 4294901760
    %227 = vmatmul.mubr.f32.gmra.mrb[0].mxu0 %v226
    %v228 = vpop.f32.mrb[0].mxu0
    %v229 = vadd.f32 %v107, %v228
    %v230 = vpop.f32.mrb[0].mxu0
    %v231 = vadd.f32 %v111, %v230
    %232 = vdwg.mxu0
    %v233 = vand.u32 %v71, 4294901760
    %v234 = vsub.f32 %v71, %v233
    %v235 = vand.u32 %v234, 4294901760
    %v236 = vsub.f32 %v234, %v235
    %v237 = vand.u32 %v236, 4294901760
    %238 = vmatprep.subr.mxu0 %v237
    %v239 = vand.u32 %v70, 4294901760
    %v240 = vsub.f32 %v70, %v239
    %v241 = vand.u32 %v240, 4294901760
    %v242 = vsub.f32 %v240, %v241
    %v243 = vand.u32 %v242, 4294901760
    %244 = vmatpush1.msra.mxu0 %v243
    %v245 = vand.u32 %v73, 4294901760
    %v246 = vsub.f32 %v73, %v245
    %v247 = vand.u32 %v246, 4294901760
    %v248 = vsub.f32 %v246, %v247
    %v249 = vand.u32 %v248, 4294901760
    %250 = vmatprep.subr.mxu0 %v249
    %v251 = vand.u32 %v72, 4294901760
    %v252 = vsub.f32 %v72, %v251
    %v253 = vand.u32 %v252, 4294901760
    %v254 = vsub.f32 %v252, %v253
    %v255 = vand.u32 %v254, 4294901760
    %256 = vmatpush1.msra.mxu0 %v255
    %v257 = vand.u32 %v75, 4294901760
    %v258 = vsub.f32 %v75, %v257
    %v259 = vand.u32 %v258, 4294901760
    %v260 = vsub.f32 %v258, %v259
    %v261 = vand.u32 %v260, 4294901760
    %262 = vmatprep.subr.mxu0 %v261
    %v263 = vand.u32 %v74, 4294901760
    %v264 = vsub.f32 %v74, %v263
    %v265 = vand.u32 %v264, 4294901760
    %v266 = vsub.f32 %v264, %v265
    %v267 = vand.u32 %v266, 4294901760
    %268 = vmatpush1.msra.mxu0 %v267
    %v269 = vand.u32 %v77, 4294901760
    %v270 = vsub.f32 %v77, %v269
    %v271 = vand.u32 %v270, 4294901760
    %v272 = vsub.f32 %v270, %v271
    %v273 = vand.u32 %v272, 4294901760
    %274 = vmatprep.subr.mxu0 %v273
    %v275 = vand.u32 %v76, 4294901760
    %v276 = vsub.f32 %v76, %v275
    %v277 = vand.u32 %v276, 4294901760
    %v278 = vsub.f32 %v276, %v277
    %v279 = vand.u32 %v278, 4294901760
    %280 = vmatpush1.msra.mxu0 %v279
    %v281 = vand.u32 %v79, 4294901760
    %v282 = vsub.f32 %v79, %v281
    %v283 = vand.u32 %v282, 4294901760
    %v284 = vsub.f32 %v282, %v283
    %v285 = vand.u32 %v284, 4294901760
    %286 = vmatprep.subr.mxu0 %v285
    %v287 = vand.u32 %v78, 4294901760
    %v288 = vsub.f32 %v78, %v287
    %v289 = vand.u32 %v288, 4294901760
    %v290 = vsub.f32 %v288, %v289
    %v291 = vand.u32 %v290, 4294901760
    %292 = vmatpush1.msra.mxu0 %v291
    %v293 = vand.u32 %v81, 4294901760
    %v294 = vsub.f32 %v81, %v293
    %v295 = vand.u32 %v294, 4294901760
    %v296 = vsub.f32 %v294, %v295
    %v297 = vand.u32 %v296, 4294901760
    %298 = vmatprep.subr.mxu0 %v297
    %v299 = vand.u32 %v80, 4294901760
    %v300 = vsub.f32 %v80, %v299
    %v301 = vand.u32 %v300, 4294901760
    %v302 = vsub.f32 %v300, %v301
    %v303 = vand.u32 %v302, 4294901760
    %304 = vmatpush1.msra.mxu0 %v303
    %v305 = vand.u32 %v83, 4294901760
    %v306 = vsub.f32 %v83, %v305
    %v307 = vand.u32 %v306, 4294901760
    %v308 = vsub.f32 %v306, %v307
    %v309 = vand.u32 %v308, 4294901760
    %310 = vmatprep.subr.mxu0 %v309
    %v311 = vand.u32 %v82, 4294901760
    %v312 = vsub.f32 %v82, %v311
    %v313 = vand.u32 %v312, 4294901760
    %v314 = vsub.f32 %v312, %v313
    %v315 = vand.u32 %v314, 4294901760
    %316 = vmatpush1.msra.mxu0 %v315
    %v317 = vand.u32 %v85, 4294901760
    %v318 = vsub.f32 %v85, %v317
    %v319 = vand.u32 %v318, 4294901760
    %v320 = vsub.f32 %v318, %v319
    %v321 = vand.u32 %v320, 4294901760
    %322 = vmatprep.subr.mxu0 %v321
    %v323 = vand.u32 %v84, 4294901760
    %v324 = vsub.f32 %v84, %v323
    %v325 = vand.u32 %v324, 4294901760
    %v326 = vsub.f32 %v324, %v325
    %v327 = vand.u32 %v326, 4294901760
    %328 = vmatpush1.msra.mxu0 %v327
    %v329 = vand.u32 %v87, 4294901760
    %v330 = vsub.f32 %v87, %v329
    %v331 = vand.u32 %v330, 4294901760
    %v332 = vsub.f32 %v330, %v331
    %v333 = vand.u32 %v332, 4294901760
    %334 = vmatprep.subr.mxu0 %v333
    %v335 = vand.u32 %v86, 4294901760
    %v336 = vsub.f32 %v86, %v335
    %v337 = vand.u32 %v336, 4294901760
    %v338 = vsub.f32 %v336, %v337
    %v339 = vand.u32 %v338, 4294901760
    %340 = vmatpush1.msra.mxu0 %v339
    %v341 = vand.u32 %v89, 4294901760
    %v342 = vsub.f32 %v89, %v341
    %v343 = vand.u32 %v342, 4294901760
    %v344 = vsub.f32 %v342, %v343
    %v345 = vand.u32 %v344, 4294901760
    %346 = vmatprep.subr.mxu0 %v345
    %v347 = vand.u32 %v88, 4294901760
    %v348 = vsub.f32 %v88, %v347
    %v349 = vand.u32 %v348, 4294901760
    %v350 = vsub.f32 %v348, %v349
    %v351 = vand.u32 %v350, 4294901760
    %352 = vmatpush1.msra.mxu0 %v351
    %v353 = vand.u32 %v91, 4294901760
    %v354 = vsub.f32 %v91, %v353
    %v355 = vand.u32 %v354, 4294901760
    %v356 = vsub.f32 %v354, %v355
    %v357 = vand.u32 %v356, 4294901760
    %358 = vmatprep.subr.mxu0 %v357
    %v359 = vand.u32 %v90, 4294901760
    %v360 = vsub.f32 %v90, %v359
    %v361 = vand.u32 %v360, 4294901760
    %v362 = vsub.f32 %v360, %v361
    %v363 = vand.u32 %v362, 4294901760
    %364 = vmatpush1.msra.mxu0 %v363
    %v365 = vand.u32 %v93, 4294901760
    %v366 = vsub.f32 %v93, %v365
    %v367 = vand.u32 %v366, 4294901760
    %v368 = vsub.f32 %v366, %v367
    %v369 = vand.u32 %v368, 4294901760
    %370 = vmatprep.subr.mxu0 %v369
    %v371 = vand.u32 %v92, 4294901760
    %v372 = vsub.f32 %v92, %v371
    %v373 = vand.u32 %v372, 4294901760
    %v374 = vsub.f32 %v372, %v373
    %v375 = vand.u32 %v374, 4294901760
    %376 = vmatpush1.msra.mxu0 %v375
    %v377 = vand.u32 %v95, 4294901760
    %v378 = vsub.f32 %v95, %v377
    %v379 = vand.u32 %v378, 4294901760
    %v380 = vsub.f32 %v378, %v379
    %v381 = vand.u32 %v380, 4294901760
    %382 = vmatprep.subr.mxu0 %v381
    %v383 = vand.u32 %v94, 4294901760
    %v384 = vsub.f32 %v94, %v383
    %v385 = vand.u32 %v384, 4294901760
    %v386 = vsub.f32 %v384, %v385
    %v387 = vand.u32 %v386, 4294901760
    %388 = vmatpush1.msra.mxu0 %v387
    %v389 = vand.u32 %v97, 4294901760
    %v390 = vsub.f32 %v97, %v389
    %v391 = vand.u32 %v390, 4294901760
    %v392 = vsub.f32 %v390, %v391
    %v393 = vand.u32 %v392, 4294901760
    %394 = vmatprep.subr.mxu0 %v393
    %v395 = vand.u32 %v96, 4294901760
    %v396 = vsub.f32 %v96, %v395
    %v397 = vand.u32 %v396, 4294901760
    %v398 = vsub.f32 %v396, %v397
    %v399 = vand.u32 %v398, 4294901760
    %400 = vmatpush1.msra.mxu0 %v399
    %v401 = vand.u32 %v99, 4294901760
    %v402 = vsub.f32 %v99, %v401
    %v403 = vand.u32 %v402, 4294901760
    %v404 = vsub.f32 %v402, %v403
    %v405 = vand.u32 %v404, 4294901760
    %406 = vmatprep.subr.mxu0 %v405
    %v407 = vand.u32 %v98, 4294901760
    %v408 = vsub.f32 %v98, %v407
    %v409 = vand.u32 %v408, 4294901760
    %v410 = vsub.f32 %v408, %v409
    %v411 = vand.u32 %v410, 4294901760
    %412 = vmatpush1.msra.mxu0 %v411
    %v413 = vand.u32 %v101, 4294901760
    %v414 = vsub.f32 %v101, %v413
    %v415 = vand.u32 %v414, 4294901760
    %v416 = vsub.f32 %v414, %v415
    %v417 = vand.u32 %v416, 4294901760
    %418 = vmatprep.subr.mxu0 %v417
    %v419 = vand.u32 %v100, 4294901760
    %v420 = vsub.f32 %v100, %v419
    %v421 = vand.u32 %v420, 4294901760
    %v422 = vsub.f32 %v420, %v421
    %v423 = vand.u32 %v422, 4294901760
    %424 = vmatpush1.msra.mxu0 %v423
    %425 = vmatprep.subr.mxu0 0.0
    %426 = vmatpush1.msra.mxu0 0.0
    %427 = vmatprep.subr.mxu0 0.0
    %428 = vmatpush1.msra.mxu0 0.0
    %429 = vmatprep.subr.mxu0 0.0
    %430 = vmatpush1.msra.mxu0 0.0
    %431 = vmatprep.subr.mxu0 0.0
    %432 = vmatpush1.msra.mxu0 0.0
    %433 = vmatprep.subr.mxu0 0.0
    %434 = vmatpush1.msra.mxu0 0.0
    %435 = vmatprep.subr.mxu0 0.0
    %436 = vmatpush1.msra.mxu0 0.0
    %437 = vmatprep.subr.mxu0 0.0
    %438 = vmatpush1.msra.mxu0 0.0
    %439 = vmatprep.subr.mxu0 0.0
    %440 = vmatpush1.msra.mxu0 0.0
    %441 = vmatprep.subr.mxu0 0.0
    %442 = vmatpush1.msra.mxu0 0.0
    %443 = vmatprep.subr.mxu0 0.0
    %444 = vmatpush1.msra.mxu0 0.0
    %445 = vmatprep.subr.mxu0 0.0
    %446 = vmatpush1.msra.mxu0 0.0
    %447 = vmatprep.subr.mxu0 0.0
    %448 = vmatpush1.msra.mxu0 0.0
    %449 = vmatprep.subr.mxu0 0.0
    %450 = vmatpush1.msra.mxu0 0.0
    %451 = vmatprep.subr.mxu0 0.0
    %452 = vmatpush1.msra.mxu0 0.0
    %453 = vmatprep.subr.mxu0 0.0
    %454 = vmatpush1.msra.mxu0 0.0
    %455 = vmatprep.subr.mxu0 0.0
    %456 = vmatpush1.msra.mxu0 0.0
    %457 = vmatprep.mubr.f32.mxu0 0.0
    %v458 = vand.u32 %v68, 4294901760
    %459 = vmatmul.mubr.f32.gmra.mrb[0].mxu0 %v458
    %v460 = vpop.f32.mrb[0].mxu0
    %v461 = vadd.f32 %v218, %v460
    %v462 = vpop.f32.mrb[0].mxu0
    %v463 = vadd.f32 %v220, %v462
    %464 = vmatprep.mubr.f32.mxu0 0.0
    %v465 = vand.u32 %v69, 4294901760
    %466 = vmatmul.mubr.f32.gmra.mrb[0].mxu0 %v465
    %v467 = vpop.f32.mrb[0].mxu0
    %v468 = vadd.f32 %v229, %v467
    %v469 = vpop.f32.mrb[0].mxu0
    %v470 = vadd.f32 %v231, %v469
    %471 = vdwg.mxu0
    %v472 = vand.u32 %v71, 4294901760
    %v473 = vsub.f32 %v71, %v472
    %474 = vmatprep.subr.mxu0 %v473
    %v475 = vand.u32 %v70, 4294901760
    %v476 = vsub.f32 %v70, %v475
    %477 = vmatpush1.msra.mxu0 %v476
    %v478 = vand.u32 %v73, 4294901760
    %v479 = vsub.f32 %v73, %v478
    %480 = vmatprep.subr.mxu0 %v479
    %v481 = vand.u32 %v72, 4294901760
    %v482 = vsub.f32 %v72, %v481
    %483 = vmatpush1.msra.mxu0 %v482
    %v484 = vand.u32 %v75, 4294901760
    %v485 = vsub.f32 %v75, %v484
    %486 = vmatprep.subr.mxu0 %v485
    %v487 = vand.u32 %v74, 4294901760
    %v488 = vsub.f32 %v74, %v487
    %489 = vmatpush1.msra.mxu0 %v488
    %v490 = vand.u32 %v77, 4294901760
    %v491 = vsub.f32 %v77, %v490
    %492 = vmatprep.subr.mxu0 %v491
    %v493 = vand.u32 %v76, 4294901760
    %v494 = vsub.f32 %v76, %v493
    %495 = vmatpush1.msra.mxu0 %v494
    %v496 = vand.u32 %v79, 4294901760
    %v497 = vsub.f32 %v79, %v496
    %498 = vmatprep.subr.mxu0 %v497
    %v499 = vand.u32 %v78, 4294901760
    %v500 = vsub.f32 %v78, %v499
    %501 = vmatpush1.msra.mxu0 %v500
    %v502 = vand.u32 %v81, 4294901760
    %v503 = vsub.f32 %v81, %v502
    %504 = vmatprep.subr.mxu0 %v503
    %v505 = vand.u32 %v80, 4294901760
    %v506 = vsub.f32 %v80, %v505
    %507 = vmatpush1.msra.mxu0 %v506
    %v508 = vand.u32 %v83, 4294901760
    %v509 = vsub.f32 %v83, %v508
    %510 = vmatprep.subr.mxu0 %v509
    %v511 = vand.u32 %v82, 4294901760
    %v512 = vsub.f32 %v82, %v511
    %513 = vmatpush1.msra.mxu0 %v512
    %v514 = vand.u32 %v85, 4294901760
    %v515 = vsub.f32 %v85, %v514
    %516 = vmatprep.subr.mxu0 %v515
    %v517 = vand.u32 %v84, 4294901760
    %v518 = vsub.f32 %v84, %v517
    %519 = vmatpush1.msra.mxu0 %v518
    %v520 = vand.u32 %v87, 4294901760
    %v521 = vsub.f32 %v87, %v520
    %522 = vmatprep.subr.mxu0 %v521
    %v523 = vand.u32 %v86, 4294901760
    %v524 = vsub.f32 %v86, %v523
    %525 = vmatpush1.msra.mxu0 %v524
    %v526 = vand.u32 %v89, 4294901760
    %v527 = vsub.f32 %v89, %v526
    %528 = vmatprep.subr.mxu0 %v527
    %v529 = vand.u32 %v88, 4294901760
    %v530 = vsub.f32 %v88, %v529
    %531 = vmatpush1.msra.mxu0 %v530
    %v532 = vand.u32 %v91, 4294901760
    %v533 = vsub.f32 %v91, %v532
    %534 = vmatprep.subr.mxu0 %v533
    %v535 = vand.u32 %v90, 4294901760
    %v536 = vsub.f32 %v90, %v535
    %537 = vmatpush1.msra.mxu0 %v536
    %v538 = vand.u32 %v93, 4294901760
    %v539 = vsub.f32 %v93, %v538
    %540 = vmatprep.subr.mxu0 %v539
    %v541 = vand.u32 %v92, 4294901760
    %v542 = vsub.f32 %v92, %v541
    %543 = vmatpush1.msra.mxu0 %v542
    %v544 = vand.u32 %v95, 4294901760
    %v545 = vsub.f32 %v95, %v544
    %546 = vmatprep.subr.mxu0 %v545
    %v547 = vand.u32 %v94, 4294901760
    %v548 = vsub.f32 %v94, %v547
    %549 = vmatpush1.msra.mxu0 %v548
    %v550 = vand.u32 %v97, 4294901760
    %v551 = vsub.f32 %v97, %v550
    %552 = vmatprep.subr.mxu0 %v551
    %v553 = vand.u32 %v96, 4294901760
    %v554 = vsub.f32 %v96, %v553
    %555 = vmatpush1.msra.mxu0 %v554
    %v556 = vand.u32 %v99, 4294901760
    %v557 = vsub.f32 %v99, %v556
    %558 = vmatprep.subr.mxu0 %v557
    %v559 = vand.u32 %v98, 4294901760
    %v560 = vsub.f32 %v98, %v559
    %561 = vmatpush1.msra.mxu0 %v560
    %v562 = vand.u32 %v101, 4294901760
    %v563 = vsub.f32 %v101, %v562
    %564 = vmatprep.subr.mxu0 %v563
    %v565 = vand.u32 %v100, 4294901760
    %v566 = vsub.f32 %v100, %v565
    %567 = vmatpush1.msra.mxu0 %v566
    %568 = vmatprep.subr.mxu0 0.0
    %569 = vmatpush1.msra.mxu0 0.0
    %570 = vmatprep.subr.mxu0 0.0
    %571 = vmatpush1.msra.mxu0 0.0
    %572 = vmatprep.subr.mxu0 0.0
    %573 = vmatpush1.msra.mxu0 0.0
    %574 = vmatprep.subr.mxu0 0.0
    %575 = vmatpush1.msra.mxu0 0.0
    %576 = vmatprep.subr.mxu0 0.0
    %577 = vmatpush1.msra.mxu0 0.0
    %578 = vmatprep.subr.mxu0 0.0
    %579 = vmatpush1.msra.mxu0 0.0
    %580 = vmatprep.subr.mxu0 0.0
    %581 = vmatpush1.msra.mxu0 0.0
    %582 = vmatprep.subr.mxu0 0.0
    %583 = vmatpush1.msra.mxu0 0.0
    %584 = vmatprep.subr.mxu0 0.0
    %585 = vmatpush1.msra.mxu0 0.0
    %586 = vmatprep.subr.mxu0 0.0
    %587 = vmatpush1.msra.mxu0 0.0
    %588 = vmatprep.subr.mxu0 0.0
    %589 = vmatpush1.msra.mxu0 0.0
    %590 = vmatprep.subr.mxu0 0.0
    %591 = vmatpush1.msra.mxu0 0.0
    %592 = vmatprep.subr.mxu0 0.0
    %593 = vmatpush1.msra.mxu0 0.0
    %594 = vmatprep.subr.mxu0 0.0
    %595 = vmatpush1.msra.mxu0 0.0
    %596 = vmatprep.subr.mxu0 0.0
    %597 = vmatpush1.msra.mxu0 0.0
    %598 = vmatprep.subr.mxu0 0.0
    %599 = vmatpush1.msra.mxu0 0.0
    %600 = vmatprep.mubr.f32.mxu0 0.0
    %v601 = vand.u32 %v68, 4294901760
    %v602 = vsub.f32 %v68, %v601
    %603 = vmatmul.mubr.f32.gmra.mrb[0].mxu0 %v602
    %v604 = vpop.f32.mrb[0].mxu0
    %v605 = vadd.f32 %v461, %v604
    %v606 = vpop.f32.mrb[0].mxu0
    %v607 = vadd.f32 %v463, %v606
    %608 = vmatprep.mubr.f32.mxu0 0.0
    %v609 = vand.u32 %v69, 4294901760
    %v610 = vsub.f32 %v69, %v609
    %611 = vmatmul.mubr.f32.gmra.mrb[0].mxu0 %v610
    %v612 = vpop.f32.mrb[0].mxu0
    %v613 = vadd.f32 %v468, %v612
    %v614 = vpop.f32.mrb[0].mxu0
    %v615 = vadd.f32 %v470, %v614
    %616 = vdwg.mxu0
    %v617 = vand.u32 %v71, 4294901760
    %618 = vmatprep.subr.mxu0 %v617
    %v619 = vand.u32 %v70, 4294901760
    %620 = vmatpush1.msra.mxu0 %v619
    %v621 = vand.u32 %v73, 4294901760
    %622 = vmatprep.subr.mxu0 %v621
    %v623 = vand.u32 %v72, 4294901760
    %624 = vmatpush1.msra.mxu0 %v623
    %v625 = vand.u32 %v75, 4294901760
    %626 = vmatprep.subr.mxu0 %v625
    %v627 = vand.u32 %v74, 4294901760
    %628 = vmatpush1.msra.mxu0 %v627
    %v629 = vand.u32 %v77, 4294901760
    %630 = vmatprep.subr.mxu0 %v629
    %v631 = vand.u32 %v76, 4294901760
    %632 = vmatpush1.msra.mxu0 %v631
    %v633 = vand.u32 %v79, 4294901760
    %634 = vmatprep.subr.mxu0 %v633
    %v635 = vand.u32 %v78, 4294901760
    %636 = vmatpush1.msra.mxu0 %v635
    %v637 = vand.u32 %v81, 4294901760
    %638 = vmatprep.subr.mxu0 %v637
    %v639 = vand.u32 %v80, 4294901760
    %640 = vmatpush1.msra.mxu0 %v639
    %v641 = vand.u32 %v83, 4294901760
    %642 = vmatprep.subr.mxu0 %v641
    %v643 = vand.u32 %v82, 4294901760
    %644 = vmatpush1.msra.mxu0 %v643
    %v645 = vand.u32 %v85, 4294901760
    %646 = vmatprep.subr.mxu0 %v645
    %v647 = vand.u32 %v84, 4294901760
    %648 = vmatpush1.msra.mxu0 %v647
    %v649 = vand.u32 %v87, 4294901760
    %650 = vmatprep.subr.mxu0 %v649
    %v651 = vand.u32 %v86, 4294901760
    %652 = vmatpush1.msra.mxu0 %v651
    %v653 = vand.u32 %v89, 4294901760
    %654 = vmatprep.subr.mxu0 %v653
    %v655 = vand.u32 %v88, 4294901760
    %656 = vmatpush1.msra.mxu0 %v655
    %v657 = vand.u32 %v91, 4294901760
    %658 = vmatprep.subr.mxu0 %v657
    %v659 = vand.u32 %v90, 4294901760
    %660 = vmatpush1.msra.mxu0 %v659
    %v661 = vand.u32 %v93, 4294901760
    %662 = vmatprep.subr.mxu0 %v661
    %v663 = vand.u32 %v92, 4294901760
    %664 = vmatpush1.msra.mxu0 %v663
    %v665 = vand.u32 %v95, 4294901760
    %666 = vmatprep.subr.mxu0 %v665
    %v667 = vand.u32 %v94, 4294901760
    %668 = vmatpush1.msra.mxu0 %v667
    %v669 = vand.u32 %v97, 4294901760
    %670 = vmatprep.subr.mxu0 %v669
    %v671 = vand.u32 %v96, 4294901760
    %672 = vmatpush1.msra.mxu0 %v671
    %v673 = vand.u32 %v99, 4294901760
    %674 = vmatprep.subr.mxu0 %v673
    %v675 = vand.u32 %v98, 4294901760
    %676 = vmatpush1.msra.mxu0 %v675
    %v677 = vand.u32 %v101, 4294901760
    %678 = vmatprep.subr.mxu0 %v677
    %v679 = vand.u32 %v100, 4294901760
    %680 = vmatpush1.msra.mxu0 %v679
    %681 = vmatprep.subr.mxu0 0.0
    %682 = vmatpush1.msra.mxu0 0.0
    %683 = vmatprep.subr.mxu0 0.0
    %684 = vmatpush1.msra.mxu0 0.0
    %685 = vmatprep.subr.mxu0 0.0
    %686 = vmatpush1.msra.mxu0 0.0
    %687 = vmatprep.subr.mxu0 0.0
    %688 = vmatpush1.msra.mxu0 0.0
    %689 = vmatprep.subr.mxu0 0.0
    %690 = vmatpush1.msra.mxu0 0.0
    %691 = vmatprep.subr.mxu0 0.0
    %692 = vmatpush1.msra.mxu0 0.0
    %693 = vmatprep.subr.mxu0 0.0
    %694 = vmatpush1.msra.mxu0 0.0
    %695 = vmatprep.subr.mxu0 0.0
    %696 = vmatpush1.msra.mxu0 0.0
    %697 = vmatprep.subr.mxu0 0.0
    %698 = vmatpush1.msra.mxu0 0.0
    %699 = vmatprep.subr.mxu0 0.0
    %700 = vmatpush1.msra.mxu0 0.0
    %701 = vmatprep.subr.mxu0 0.0
    %702 = vmatpush1.msra.mxu0 0.0
    %703 = vmatprep.subr.mxu0 0.0
    %704 = vmatpush1.msra.mxu0 0.0
    %705 = vmatprep.subr.mxu0 0.0
    %706 = vmatpush1.msra.mxu0 0.0
    %707 = vmatprep.subr.mxu0 0.0
    %708 = vmatpush1.msra.mxu0 0.0
    %709 = vmatprep.subr.mxu0 0.0
    %710 = vmatpush1.msra.mxu0 0.0
    %711 = vmatprep.subr.mxu0 0.0
    %712 = vmatpush1.msra.mxu0 0.0
    %713 = vmatprep.mubr.f32.mxu0 0.0
    %v714 = vand.u32 %v68, 4294901760
    %v715 = vsub.f32 %v68, %v714
    %v716 = vand.u32 %v715, 4294901760
    %717 = vmatmul.mubr.f32.gmra.mrb[0].mxu0 %v716
    %v718 = vpop.f32.mrb[0].mxu0
    %v719 = vadd.f32 %v605, %v718
    %v720 = vpop.f32.mrb[0].mxu0
    %v721 = vadd.f32 %v607, %v720
    %722 = vmatprep.mubr.f32.mxu0 0.0
    %v723 = vand.u32 %v69, 4294901760
    %v724 = vsub.f32 %v69, %v723
    %v725 = vand.u32 %v724, 4294901760
    %726 = vmatmul.mubr.f32.gmra.mrb[0].mxu0 %v725
    %v727 = vpop.f32.mrb[0].mxu0
    %v728 = vadd.f32 %v613, %v727
    %v729 = vpop.f32.mrb[0].mxu0
    %v730 = vadd.f32 %v615, %v729
    %731 = vdwg.mxu0
    %v732 = vand.u32 %v71, 4294901760
    %v733 = vsub.f32 %v71, %v732
    %v734 = vand.u32 %v733, 4294901760
    %735 = vmatprep.subr.mxu0 %v734
    %v736 = vand.u32 %v70, 4294901760
    %v737 = vsub.f32 %v70, %v736
    %v738 = vand.u32 %v737, 4294901760
    %739 = vmatpush1.msra.mxu0 %v738
    %v740 = vand.u32 %v73, 4294901760
    %v741 = vsub.f32 %v73, %v740
    %v742 = vand.u32 %v741, 4294901760
    %743 = vmatprep.subr.mxu0 %v742
    %v744 = vand.u32 %v72, 4294901760
    %v745 = vsub.f32 %v72, %v744
    %v746 = vand.u32 %v745, 4294901760
    %747 = vmatpush1.msra.mxu0 %v746
    %v748 = vand.u32 %v75, 4294901760
    %v749 = vsub.f32 %v75, %v748
    %v750 = vand.u32 %v749, 4294901760
    %751 = vmatprep.subr.mxu0 %v750
    %v752 = vand.u32 %v74, 4294901760
    %v753 = vsub.f32 %v74, %v752
    %v754 = vand.u32 %v753, 4294901760
    %755 = vmatpush1.msra.mxu0 %v754
    %v756 = vand.u32 %v77, 4294901760
    %v757 = vsub.f32 %v77, %v756
    %v758 = vand.u32 %v757, 4294901760
    %759 = vmatprep.subr.mxu0 %v758
    %v760 = vand.u32 %v76, 4294901760
    %v761 = vsub.f32 %v76, %v760
    %v762 = vand.u32 %v761, 4294901760
    %763 = vmatpush1.msra.mxu0 %v762
    %v764 = vand.u32 %v79, 4294901760
    %v765 = vsub.f32 %v79, %v764
    %v766 = vand.u32 %v765, 4294901760
    %767 = vmatprep.subr.mxu0 %v766
    %v768 = vand.u32 %v78, 4294901760
    %v769 = vsub.f32 %v78, %v768
    %v770 = vand.u32 %v769, 4294901760
    %771 = vmatpush1.msra.mxu0 %v770
    %v772 = vand.u32 %v81, 4294901760
    %v773 = vsub.f32 %v81, %v772
    %v774 = vand.u32 %v773, 4294901760
    %775 = vmatprep.subr.mxu0 %v774
    %v776 = vand.u32 %v80, 4294901760
    %v777 = vsub.f32 %v80, %v776
    %v778 = vand.u32 %v777, 4294901760
    %779 = vmatpush1.msra.mxu0 %v778
    %v780 = vand.u32 %v83, 4294901760
    %v781 = vsub.f32 %v83, %v780
    %v782 = vand.u32 %v781, 4294901760
    %783 = vmatprep.subr.mxu0 %v782
    %v784 = vand.u32 %v82, 4294901760
    %v785 = vsub.f32 %v82, %v784
    %v786 = vand.u32 %v785, 4294901760
    %787 = vmatpush1.msra.mxu0 %v786
    %v788 = vand.u32 %v85, 4294901760
    %v789 = vsub.f32 %v85, %v788
    %v790 = vand.u32 %v789, 4294901760
    %791 = vmatprep.subr.mxu0 %v790
    %v792 = vand.u32 %v84, 4294901760
    %v793 = vsub.f32 %v84, %v792
    %v794 = vand.u32 %v793, 4294901760
    %795 = vmatpush1.msra.mxu0 %v794
    %v796 = vand.u32 %v87, 4294901760
    %v797 = vsub.f32 %v87, %v796
    %v798 = vand.u32 %v797, 4294901760
    %799 = vmatprep.subr.mxu0 %v798
    %v800 = vand.u32 %v86, 4294901760
    %v801 = vsub.f32 %v86, %v800
    %v802 = vand.u32 %v801, 4294901760
    %803 = vmatpush1.msra.mxu0 %v802
    %v804 = vand.u32 %v89, 4294901760
    %v805 = vsub.f32 %v89, %v804
    %v806 = vand.u32 %v805, 4294901760
    %807 = vmatprep.subr.mxu0 %v806
    %v808 = vand.u32 %v88, 4294901760
    %v809 = vsub.f32 %v88, %v808
    %v810 = vand.u32 %v809, 4294901760
    %811 = vmatpush1.msra.mxu0 %v810
    %v812 = vand.u32 %v91, 4294901760
    %v813 = vsub.f32 %v91, %v812
    %v814 = vand.u32 %v813, 4294901760
    %815 = vmatprep.subr.mxu0 %v814
    %v816 = vand.u32 %v90, 4294901760
    %v817 = vsub.f32 %v90, %v816
    %v818 = vand.u32 %v817, 4294901760
    %819 = vmatpush1.msra.mxu0 %v818
    %v820 = vand.u32 %v93, 4294901760
    %v821 = vsub.f32 %v93, %v820
    %v822 = vand.u32 %v821, 4294901760
    %823 = vmatprep.subr.mxu0 %v822
    %v824 = vand.u32 %v92, 4294901760
    %v825 = vsub.f32 %v92, %v824
    %v826 = vand.u32 %v825, 4294901760
    %827 = vmatpush1.msra.mxu0 %v826
    %v828 = vand.u32 %v95, 4294901760
    %v829 = vsub.f32 %v95, %v828
    %v830 = vand.u32 %v829, 4294901760
    %831 = vmatprep.subr.mxu0 %v830
    %v832 = vand.u32 %v94, 4294901760
    %v833 = vsub.f32 %v94, %v832
    %v834 = vand.u32 %v833, 4294901760
    %835 = vmatpush1.msra.mxu0 %v834
    %v836 = vand.u32 %v97, 4294901760
    %v837 = vsub.f32 %v97, %v836
    %v838 = vand.u32 %v837, 4294901760
    %839 = vmatprep.subr.mxu0 %v838
    %v840 = vand.u32 %v96, 4294901760
    %v841 = vsub.f32 %v96, %v840
    %v842 = vand.u32 %v841, 4294901760
    %843 = vmatpush1.msra.mxu0 %v842
    %v844 = vand.u32 %v99, 4294901760
    %v845 = vsub.f32 %v99, %v844
    %v846 = vand.u32 %v845, 4294901760
    %847 = vmatprep.subr.mxu0 %v846
    %v848 = vand.u32 %v98, 4294901760
    %v849 = vsub.f32 %v98, %v848
    %v850 = vand.u32 %v849, 4294901760
    %851 = vmatpush1.msra.mxu0 %v850
    %v852 = vand.u32 %v101, 4294901760
    %v853 = vsub.f32 %v101, %v852
    %v854 = vand.u32 %v853, 4294901760
    %855 = vmatprep.subr.mxu0 %v854
    %v856 = vand.u32 %v100, 4294901760
    %v857 = vsub.f32 %v100, %v856
    %v858 = vand.u32 %v857, 4294901760
    %859 = vmatpush1.msra.mxu0 %v858
    %860 = vmatprep.subr.mxu0 0.0
    %861 = vmatpush1.msra.mxu0 0.0
    %862 = vmatprep.subr.mxu0 0.0
    %863 = vmatpush1.msra.mxu0 0.0
    %864 = vmatprep.subr.mxu0 0.0
    %865 = vmatpush1.msra.mxu0 0.0
    %866 = vmatprep.subr.mxu0 0.0
    %867 = vmatpush1.msra.mxu0 0.0
    %868 = vmatprep.subr.mxu0 0.0
    %869 = vmatpush1.msra.mxu0 0.0
    %870 = vmatprep.subr.mxu0 0.0
    %871 = vmatpush1.msra.mxu0 0.0
    %872 = vmatprep.subr.mxu0 0.0
    %873 = vmatpush1.msra.mxu0 0.0
    %874 = vmatprep.subr.mxu0 0.0
    %875 = vmatpush1.msra.mxu0 0.0
    %876 = vmatprep.subr.mxu0 0.0
    %877 = vmatpush1.msra.mxu0 0.0
    %878 = vmatprep.subr.mxu0 0.0
    %879 = vmatpush1.msra.mxu0 0.0
    %880 = vmatprep.subr.mxu0 0.0
    %881 = vmatpush1.msra.mxu0 0.0
    %882 = vmatprep.subr.mxu0 0.0
    %883 = vmatpush1.msra.mxu0 0.0
    %884 = vmatprep.subr.mxu0 0.0
    %885 = vmatpush1.msra.mxu0 0.0
    %886 = vmatprep.subr.mxu0 0.0
    %887 = vmatpush1.msra.mxu0 0.0
    %888 = vmatprep.subr.mxu0 0.0
    %889 = vmatpush1.msra.mxu0 0.0
    %890 = vmatprep.subr.mxu0 0.0
    %891 = vmatpush1.msra.mxu0 0.0
    %892 = vmatprep.mubr.f32.mxu0 0.0
    %v893 = vand.u32 %v68, 4294901760
    %894 = vmatmul.mubr.f32.gmra.mrb[0].mxu0 %v893
    %v895 = vpop.f32.mrb[0].mxu0
    %v896 = vadd.f32 %v719, %v895
    %v897 = vpop.f32.mrb[0].mxu0
    %v898 = vadd.f32 %v721, %v897
    %899 = vmatprep.mubr.f32.mxu0 0.0
    %v900 = vand.u32 %v69, 4294901760
    %901 = vmatmul.mubr.f32.gmra.mrb[0].mxu0 %v900
    %v902 = vpop.f32.mrb[0].mxu0
    %v903 = vadd.f32 %v728, %v902
    %v904 = vpop.f32.mrb[0].mxu0
    %v905 = vadd.f32 %v730, %v904
    %906 = vdwg.mxu0
    %v907 = vand.u32 %v71, 4294901760
    %908 = vmatprep.subr.mxu0 %v907
    %v909 = vand.u32 %v70, 4294901760
    %910 = vmatpush1.msra.mxu0 %v909
    %v911 = vand.u32 %v73, 4294901760
    %912 = vmatprep.subr.mxu0 %v911
    %v913 = vand.u32 %v72, 4294901760
    %914 = vmatpush1.msra.mxu0 %v913
    %v915 = vand.u32 %v75, 4294901760
    %916 = vmatprep.subr.mxu0 %v915
    %v917 = vand.u32 %v74, 4294901760
    %918 = vmatpush1.msra.mxu0 %v917
    %v919 = vand.u32 %v77, 4294901760
    %920 = vmatprep.subr.mxu0 %v919
    %v921 = vand.u32 %v76, 4294901760
    %922 = vmatpush1.msra.mxu0 %v921
    %v923 = vand.u32 %v79, 4294901760
    %924 = vmatprep.subr.mxu0 %v923
    %v925 = vand.u32 %v78, 4294901760
    %926 = vmatpush1.msra.mxu0 %v925
    %v927 = vand.u32 %v81, 4294901760
    %928 = vmatprep.subr.mxu0 %v927
    %v929 = vand.u32 %v80, 4294901760
    %930 = vmatpush1.msra.mxu0 %v929
    %v931 = vand.u32 %v83, 4294901760
    %932 = vmatprep.subr.mxu0 %v931
    %v933 = vand.u32 %v82, 4294901760
    %934 = vmatpush1.msra.mxu0 %v933
    %v935 = vand.u32 %v85, 4294901760
    %936 = vmatprep.subr.mxu0 %v935
    %v937 = vand.u32 %v84, 4294901760
    %938 = vmatpush1.msra.mxu0 %v937
    %v939 = vand.u32 %v87, 4294901760
    %940 = vmatprep.subr.mxu0 %v939
    %v941 = vand.u32 %v86, 4294901760
    %942 = vmatpush1.msra.mxu0 %v941
    %v943 = vand.u32 %v89, 4294901760
    %944 = vmatprep.subr.mxu0 %v943
    %v945 = vand.u32 %v88, 4294901760
    %946 = vmatpush1.msra.mxu0 %v945
    %v947 = vand.u32 %v91, 4294901760
    %948 = vmatprep.subr.mxu0 %v947
    %v949 = vand.u32 %v90, 4294901760
    %950 = vmatpush1.msra.mxu0 %v949
    %v951 = vand.u32 %v93, 4294901760
    %952 = vmatprep.subr.mxu0 %v951
    %v953 = vand.u32 %v92, 4294901760
    %954 = vmatpush1.msra.mxu0 %v953
    %v955 = vand.u32 %v95, 4294901760
    %956 = vmatprep.subr.mxu0 %v955
    %v957 = vand.u32 %v94, 4294901760
    %958 = vmatpush1.msra.mxu0 %v957
    %v959 = vand.u32 %v97, 4294901760
    %960 = vmatprep.subr.mxu0 %v959
    %v961 = vand.u32 %v96, 4294901760
    %962 = vmatpush1.msra.mxu0 %v961
    %v963 = vand.u32 %v99, 4294901760
    %964 = vmatprep.subr.mxu0 %v963
    %v965 = vand.u32 %v98, 4294901760
    %966 = vmatpush1.msra.mxu0 %v965
    %v967 = vand.u32 %v101, 4294901760
    %968 = vmatprep.subr.mxu0 %v967
    %v969 = vand.u32 %v100, 4294901760
    %970 = vmatpush1.msra.mxu0 %v969
    %971 = vmatprep.subr.mxu0 0.0
    %972 = vmatpush1.msra.mxu0 0.0
    %973 = vmatprep.subr.mxu0 0.0
    %974 = vmatpush1.msra.mxu0 0.0
    %975 = vmatprep.subr.mxu0 0.0
    %976 = vmatpush1.msra.mxu0 0.0
    %977 = vmatprep.subr.mxu0 0.0
    %978 = vmatpush1.msra.mxu0 0.0
    %979 = vmatprep.subr.mxu0 0.0
    %980 = vmatpush1.msra.mxu0 0.0
    %981 = vmatprep.subr.mxu0 0.0
    %982 = vmatpush1.msra.mxu0 0.0
    %983 = vmatprep.subr.mxu0 0.0
    %984 = vmatpush1.msra.mxu0 0.0
    %985 = vmatprep.subr.mxu0 0.0
    %986 = vmatpush1.msra.mxu0 0.0
    %987 = vmatprep.subr.mxu0 0.0
    %988 = vmatpush1.msra.mxu0 0.0
    %989 = vmatprep.subr.mxu0 0.0
    %990 = vmatpush1.msra.mxu0 0.0
    %991 = vmatprep.subr.mxu0 0.0
    %992 = vmatpush1.msra.mxu0 0.0
    %993 = vmatprep.subr.mxu0 0.0
    %994 = vmatpush1.msra.mxu0 0.0
    %995 = vmatprep.subr.mxu0 0.0
    %996 = vmatpush1.msra.mxu0 0.0
    %997 = vmatprep.subr.mxu0 0.0
    %998 = vmatpush1.msra.mxu0 0.0
    %999 = vmatprep.subr.mxu0 0.0
    %1000 = vmatpush1.msra.mxu0 0.0
    %1001 = vmatprep.subr.mxu0 0.0
    %1002 = vmatpush1.msra.mxu0 0.0
    %1003 = vmatprep.mubr.f32.mxu0 0.0
    %v1004 = vand.u32 %v68, 4294901760
    %1005 = vmatmul.mubr.f32.gmra.mrb[0].mxu0 %v1004
    %v1006 = vpop.f32.mrb[0].mxu0
    %v1007 = vadd.f32 %v896, %v1006
    %v1008 = vpop.f32.mrb[0].mxu0
    %v1009 = vadd.f32 %v898, %v1008
    %1010 = vmatprep.mubr.f32.mxu0 0.0
    %v1011 = vand.u32 %v69, 4294901760
    %1012 = vmatmul.mubr.f32.gmra.mrb[0].mxu0 %v1011
    %v1013 = vpop.f32.mrb[0].mxu0
    %v1014 = vadd.f32 %v903, %v1013
    %v1015 = vpop.f32.mrb[0].mxu0
    %v1016 = vadd.f32 %v905, %v1015
    %1017 = vdwg.mxu0
    %v1018 = vmax.f32 %v1007, 0.0
    %v1019 = vmax.f32 %v1009, 0.0
    %v1020 = vmax.f32 %v1014, 0.0
    %v1021 = vmax.f32 %v1016, 0.0
    %v1022 = vld [vmem:[#allocation2] sm:$0xff]
    %v1023 = vld [vmem:[#allocation2 + $0x8] sm:$0xff]
    %v1024 = vld [vmem:[#allocation8] sm:$0xff]
    %v1025 = vld [vmem:[#allocation8 + $0x8] sm:$0xff]
    %v1026 = vld [vmem:[#allocation8 + $0x10] sm:$0xff]
    %v1027 = vld [vmem:[#allocation8 + $0x18] sm:$0xff]
    %v1028 = vld [vmem:[#allocation8 + $0x20] sm:$0xff]
    %v1029 = vld [vmem:[#allocation8 + $0x28] sm:$0xff]
    %v1030 = vld [vmem:[#allocation8 + $0x30] sm:$0xff]
    %v1031 = vld [vmem:[#allocation8 + $0x38] sm:$0xff]
    %v1032 = vld [vmem:[#allocation8 + $0x40] sm:$0xff]
    %v1033 = vld [vmem:[#allocation8 + $0x48] sm:$0xff]
    %v1034 = vld [vmem:[#allocation8 + $0x50] sm:$0xff]
    %v1035 = vld [vmem:[#allocation8 + $0x58] sm:$0xff]
    %v1036 = vld [vmem:[#allocation8 + $0x60] sm:$0xff]
    %v1037 = vld [vmem:[#allocation8 + $0x68] sm:$0xff]
    %v1038 = vld [vmem:[#allocation8 + $0x70] sm:$0xff]
    %v1039 = vld [vmem:[#allocation8 + $0x78] sm:$0xff]
    %v1040 = vld [vmem:[#allocation8 + $0x80] sm:$0xff]
    %v1041 = vld [vmem:[#allocation8 + $0x88] sm:$0xff]
    %v1042 = vld [vmem:[#allocation8 + $0x90] sm:$0xff]
    %v1043 = vld [vmem:[#allocation8 + $0x98] sm:$0xff]
    %v1044 = vld [vmem:[#allocation8 + $0xa0] sm:$0xff]
    %v1045 = vld [vmem:[#allocation8 + $0xa8] sm:$0xff]
    %v1046 = vld [vmem:[#allocation8 + $0xb0] sm:$0xff]
    %v1047 = vld [vmem:[#allocation8 + $0xb8] sm:$0xff]
    %v1048 = vld [vmem:[#allocation8 + $0xc0] sm:$0xff]
    %v1049 = vld [vmem:[#allocation8 + $0xc8] sm:$0xff]
    %v1050 = vld [vmem:[#allocation8 + $0xd0] sm:$0xff]
    %v1051 = vld [vmem:[#allocation8 + $0xd8] sm:$0xff]
    %v1052 = vld [vmem:[#allocation8 + $0xe0] sm:$0xff]
    %v1053 = vld [vmem:[#allocation8 + $0xe8] sm:$0xff]
    %v1054 = vld [vmem:[#allocation8 + $0xf0] sm:$0xff]
    %v1055 = vld [vmem:[#allocation8 + $0xf8] sm:$0xff]
    %1056 = vmatprep.subr.mxu0 0.0
    %v1057 = vand.u32 %v1024, 4294901760
    %1058 = vmatpush1.msra.mxu0 %v1057
    %1059 = vmatprep.subr.mxu0 0.0
    %v1060 = vand.u32 %v1025, 4294901760
    %1061 = vmatpush1.msra.mxu0 %v1060
    %1062 = vmatprep.subr.mxu0 0.0
    %v1063 = vand.u32 %v1026, 4294901760
    %1064 = vmatpush1.msra.mxu0 %v1063
    %1065 = vmatprep.subr.mxu0 0.0
    %v1066 = vand.u32 %v1027, 4294901760
    %1067 = vmatpush1.msra.mxu0 %v1066
    %1068 = vmatprep.subr.mxu0 0.0
    %v1069 = vand.u32 %v1028, 4294901760
    %1070 = vmatpush1.msra.mxu0 %v1069
    %1071 = vmatprep.subr.mxu0 0.0
    %v1072 = vand.u32 %v1029, 4294901760
    %1073 = vmatpush1.msra.mxu0 %v1072
    %1074 = vmatprep.subr.mxu0 0.0
    %v1075 = vand.u32 %v1030, 4294901760
    %1076 = vmatpush1.msra.mxu0 %v1075
    %1077 = vmatprep.subr.mxu0 0.0
    %v1078 = vand.u32 %v1031, 4294901760
    %1079 = vmatpush1.msra.mxu0 %v1078
    %1080 = vmatprep.subr.mxu0 0.0
    %v1081 = vand.u32 %v1032, 4294901760
    %1082 = vmatpush1.msra.mxu0 %v1081
    %1083 = vmatprep.subr.mxu0 0.0
    %v1084 = vand.u32 %v1033, 4294901760
    %1085 = vmatpush1.msra.mxu0 %v1084
    %1086 = vmatprep.subr.mxu0 0.0
    %v1087 = vand.u32 %v1034, 4294901760
    %1088 = vmatpush1.msra.mxu0 %v1087
    %1089 = vmatprep.subr.mxu0 0.0
    %v1090 = vand.u32 %v1035, 4294901760
    %1091 = vmatpush1.msra.mxu0 %v1090
    %1092 = vmatprep.subr.mxu0 0.0
    %v1093 = vand.u32 %v1036, 4294901760
    %1094 = vmatpush1.msra.mxu0 %v1093
    %1095 = vmatprep.subr.mxu0 0.0
    %v1096 = vand.u32 %v1037, 4294901760
    %1097 = vmatpush1.msra.mxu0 %v1096
    %1098 = vmatprep.subr.mxu0 0.0
    %v1099 = vand.u32 %v1038, 4294901760
    %1100 = vmatpush1.msra.mxu0 %v1099
    %1101 = vmatprep.subr.mxu0 0.0
    %v1102 = vand.u32 %v1039, 4294901760
    %1103 = vmatpush1.msra.mxu0 %v1102
    %1104 = vmatprep.subr.mxu0 0.0
    %v1105 = vand.u32 %v1040, 4294901760
    %1106 = vmatpush1.msra.mxu0 %v1105
    %1107 = vmatprep.subr.mxu0 0.0
    %v1108 = vand.u32 %v1041, 4294901760
    %1109 = vmatpush1.msra.mxu0 %v1108
    %1110 = vmatprep.subr.mxu0 0.0
    %v1111 = vand.u32 %v1042, 4294901760
    %1112 = vmatpush1.msra.mxu0 %v1111
    %1113 = vmatprep.subr.mxu0 0.0
    %v1114 = vand.u32 %v1043, 4294901760
    %1115 = vmatpush1.msra.mxu0 %v1114
    %1116 = vmatprep.subr.mxu0 0.0
    %v1117 = vand.u32 %v1044, 4294901760
    %1118 = vmatpush1.msra.mxu0 %v1117
    %1119 = vmatprep.subr.mxu0 0.0
    %v1120 = vand.u32 %v1045, 4294901760
    %1121 = vmatpush1.msra.mxu0 %v1120
    %1122 = vmatprep.subr.mxu0 0.0
    %v1123 = vand.u32 %v1046, 4294901760
    %1124 = vmatpush1.msra.mxu0 %v1123
    %1125 = vmatprep.subr.mxu0 0.0
    %v1126 = vand.u32 %v1047, 4294901760
    %1127 = vmatpush1.msra.mxu0 %v1126
    %1128 = vmatprep.subr.mxu0 0.0
    %v1129 = vand.u32 %v1048, 4294901760
    %1130 = vmatpush1.msra.mxu0 %v1129
    %1131 = vmatprep.subr.mxu0 0.0
    %v1132 = vand.u32 %v1049, 4294901760
    %1133 = vmatpush1.msra.mxu0 %v1132
    %1134 = vmatprep.subr.mxu0 0.0
    %v1135 = vand.u32 %v1050, 4294901760
    %1136 = vmatpush1.msra.mxu0 %v1135
    %1137 = vmatprep.subr.mxu0 0.0
    %v1138 = vand.u32 %v1051, 4294901760
    %1139 = vmatpush1.msra.mxu0 %v1138
    %1140 = vmatprep.subr.mxu0 0.0
    %v1141 = vand.u32 %v1052, 4294901760
    %1142 = vmatpush1.msra.mxu0 %v1141
    %1143 = vmatprep.subr.mxu0 0.0
    %v1144 = vand.u32 %v1053, 4294901760
    %1145 = vmatpush1.msra.mxu0 %v1144
    %1146 = vmatprep.subr.mxu0 0.0
    %v1147 = vand.u32 %v1054, 4294901760
    %1148 = vmatpush1.msra.mxu0 %v1147
    %1149 = vmatprep.subr.mxu0 0.0
    %v1150 = vand.u32 %v1055, 4294901760
    %1151 = vmatpush1.msra.mxu0 %v1150
    %v1152 = vand.u32 %v1019, 4294901760
    %v1153 = vsub.f32 %v1019, %v1152
    %v1154 = vand.u32 %v1153, 4294901760
    %v1155 = vsub.f32 %v1153, %v1154
    %v1156 = vand.u32 %v1155, 4294901760
    %1157 = vmatprep.mubr.f32.mxu0 %v1156
    %v1158 = vand.u32 %v1018, 4294901760
    %v1159 = vsub.f32 %v1018, %v1158
    %v1160 = vand.u32 %v1159, 4294901760
    %v1161 = vsub.f32 %v1159, %v1160
    %v1162 = vand.u32 %v1161, 4294901760
    %1163 = vmatmul.mubr.f32.gmra.mrb[0].mxu0 %v1162
    %v1164 = vpop.f32.mrb[0].mxu0
    %v1165 = vadd.f32 0.0, %v1164
    %v1166 = vpop.f32.mrb[0].mxu0
    %v1167 = vand.u32 %v1021, 4294901760
    %v1168 = vsub.f32 %v1021, %v1167
    %v1169 = vand.u32 %v1168, 4294901760
    %v1170 = vsub.f32 %v1168, %v1169
    %v1171 = vand.u32 %v1170, 4294901760
    %1172 = vmatprep.mubr.f32.mxu0 %v1171
    %v1173 = vand.u32 %v1020, 4294901760
    %v1174 = vsub.f32 %v1020, %v1173
    %v1175 = vand.u32 %v1174, 4294901760
    %v1176 = vsub.f32 %v1174, %v1175
    %v1177 = vand.u32 %v1176, 4294901760
    %1178 = vmatmul.mubr.f32.gmra.mrb[0].mxu0 %v1177
    %v1179 = vpop.f32.mrb[0].mxu0
    %v1180 = vadd.f32 0.0, %v1179
    %v1181 = vpop.f32.mrb[0].mxu0
    %1182 = vdwg.mxu0
    %1183 = vmatprep.subr.mxu0 0.0
    %v1184 = vand.u32 %v1024, 4294901760
    %v1185 = vsub.f32 %v1024, %v1184
    %v1186 = vand.u32 %v1185, 4294901760
    %v1187 = vsub.f32 %v1185, %v1186
    %v1188 = vand.u32 %v1187, 4294901760
    %1189 = vmatpush1.msra.mxu0 %v1188
    %1190 = vmatprep.subr.mxu0 0.0
    %v1191 = vand.u32 %v1025, 4294901760
    %v1192 = vsub.f32 %v1025, %v1191
    %v1193 = vand.u32 %v1192, 4294901760
    %v1194 = vsub.f32 %v1192, %v1193
    %v1195 = vand.u32 %v1194, 4294901760
    %1196 = vmatpush1.msra.mxu0 %v1195
    %1197 = vmatprep.subr.mxu0 0.0
    %v1198 = vand.u32 %v1026, 4294901760
    %v1199 = vsub.f32 %v1026, %v1198
    %v1200 = vand.u32 %v1199, 4294901760
    %v1201 = vsub.f32 %v1199, %v1200
    %v1202 = vand.u32 %v1201, 4294901760
    %1203 = vmatpush1.msra.mxu0 %v1202
    %1204 = vmatprep.subr.mxu0 0.0
    %v1205 = vand.u32 %v1027, 4294901760
    %v1206 = vsub.f32 %v1027, %v1205
    %v1207 = vand.u32 %v1206, 4294901760
    %v1208 = vsub.f32 %v1206, %v1207
    %v1209 = vand.u32 %v1208, 4294901760
    %1210 = vmatpush1.msra.mxu0 %v1209
    %1211 = vmatprep.subr.mxu0 0.0
    %v1212 = vand.u32 %v1028, 4294901760
    %v1213 = vsub.f32 %v1028, %v1212
    %v1214 = vand.u32 %v1213, 4294901760
    %v1215 = vsub.f32 %v1213, %v1214
    %v1216 = vand.u32 %v1215, 4294901760
    %1217 = vmatpush1.msra.mxu0 %v1216
    %1218 = vmatprep.subr.mxu0 0.0
    %v1219 = vand.u32 %v1029, 4294901760
    %v1220 = vsub.f32 %v1029, %v1219
    %v1221 = vand.u32 %v1220, 4294901760
    %v1222 = vsub.f32 %v1220, %v1221
    %v1223 = vand.u32 %v1222, 4294901760
    %1224 = vmatpush1.msra.mxu0 %v1223
    %1225 = vmatprep.subr.mxu0 0.0
    %v1226 = vand.u32 %v1030, 4294901760
    %v1227 = vsub.f32 %v1030, %v1226
    %v1228 = vand.u32 %v1227, 4294901760
    %v1229 = vsub.f32 %v1227, %v1228
    %v1230 = vand.u32 %v1229, 4294901760
    %1231 = vmatpush1.msra.mxu0 %v1230
    %1232 = vmatprep.subr.mxu0 0.0
    %v1233 = vand.u32 %v1031, 4294901760
    %v1234 = vsub.f32 %v1031, %v1233
    %v1235 = vand.u32 %v1234, 4294901760
    %v1236 = vsub.f32 %v1234, %v1235
    %v1237 = vand.u32 %v1236, 4294901760
    %1238 = vmatpush1.msra.mxu0 %v1237
    %1239 = vmatprep.subr.mxu0 0.0
    %v1240 = vand.u32 %v1032, 4294901760
    %v1241 = vsub.f32 %v1032, %v1240
    %v1242 = vand.u32 %v1241, 4294901760
    %v1243 = vsub.f32 %v1241, %v1242
    %v1244 = vand.u32 %v1243, 4294901760
    %1245 = vmatpush1.msra.mxu0 %v1244
    %1246 = vmatprep.subr.mxu0 0.0
    %v1247 = vand.u32 %v1033, 4294901760
    %v1248 = vsub.f32 %v1033, %v1247
    %v1249 = vand.u32 %v1248, 4294901760
    %v1250 = vsub.f32 %v1248, %v1249
    %v1251 = vand.u32 %v1250, 4294901760
    %1252 = vmatpush1.msra.mxu0 %v1251
    %1253 = vmatprep.subr.mxu0 0.0
    %v1254 = vand.u32 %v1034, 4294901760
    %v1255 = vsub.f32 %v1034, %v1254
    %v1256 = vand.u32 %v1255, 4294901760
    %v1257 = vsub.f32 %v1255, %v1256
    %v1258 = vand.u32 %v1257, 4294901760
    %1259 = vmatpush1.msra.mxu0 %v1258
    %1260 = vmatprep.subr.mxu0 0.0
    %v1261 = vand.u32 %v1035, 4294901760
    %v1262 = vsub.f32 %v1035, %v1261
    %v1263 = vand.u32 %v1262, 4294901760
    %v1264 = vsub.f32 %v1262, %v1263
    %v1265 = vand.u32 %v1264, 4294901760
    %1266 = vmatpush1.msra.mxu0 %v1265
    %1267 = vmatprep.subr.mxu0 0.0
    %v1268 = vand.u32 %v1036, 4294901760
    %v1269 = vsub.f32 %v1036, %v1268
    %v1270 = vand.u32 %v1269, 4294901760
    %v1271 = vsub.f32 %v1269, %v1270
    %v1272 = vand.u32 %v1271, 4294901760
    %1273 = vmatpush1.msra.mxu0 %v1272
    %1274 = vmatprep.subr.mxu0 0.0
    %v1275 = vand.u32 %v1037, 4294901760
    %v1276 = vsub.f32 %v1037, %v1275
    %v1277 = vand.u32 %v1276, 4294901760
    %v1278 = vsub.f32 %v1276, %v1277
    %v1279 = vand.u32 %v1278, 4294901760
    %1280 = vmatpush1.msra.mxu0 %v1279
    %1281 = vmatprep.subr.mxu0 0.0
    %v1282 = vand.u32 %v1038, 4294901760
    %v1283 = vsub.f32 %v1038, %v1282
    %v1284 = vand.u32 %v1283, 4294901760
    %v1285 = vsub.f32 %v1283, %v1284
    %v1286 = vand.u32 %v1285, 4294901760
    %1287 = vmatpush1.msra.mxu0 %v1286
    %1288 = vmatprep.subr.mxu0 0.0
    %v1289 = vand.u32 %v1039, 4294901760
    %v1290 = vsub.f32 %v1039, %v1289
    %v1291 = vand.u32 %v1290, 4294901760
    %v1292 = vsub.f32 %v1290, %v1291
    %v1293 = vand.u32 %v1292, 4294901760
    %1294 = vmatpush1.msra.mxu0 %v1293
    %1295 = vmatprep.subr.mxu0 0.0
    %v1296 = vand.u32 %v1040, 4294901760
    %v1297 = vsub.f32 %v1040, %v1296
    %v1298 = vand.u32 %v1297, 4294901760
    %v1299 = vsub.f32 %v1297, %v1298
    %v1300 = vand.u32 %v1299, 4294901760
    %1301 = vmatpush1.msra.mxu0 %v1300
    %1302 = vmatprep.subr.mxu0 0.0
    %v1303 = vand.u32 %v1041, 4294901760
    %v1304 = vsub.f32 %v1041, %v1303
    %v1305 = vand.u32 %v1304, 4294901760
    %v1306 = vsub.f32 %v1304, %v1305
    %v1307 = vand.u32 %v1306, 4294901760
    %1308 = vmatpush1.msra.mxu0 %v1307
    %1309 = vmatprep.subr.mxu0 0.0
    %v1310 = vand.u32 %v1042, 4294901760
    %v1311 = vsub.f32 %v1042, %v1310
    %v1312 = vand.u32 %v1311, 4294901760
    %v1313 = vsub.f32 %v1311, %v1312
    %v1314 = vand.u32 %v1313, 4294901760
    %1315 = vmatpush1.msra.mxu0 %v1314
    %1316 = vmatprep.subr.mxu0 0.0
    %v1317 = vand.u32 %v1043, 4294901760
    %v1318 = vsub.f32 %v1043, %v1317
    %v1319 = vand.u32 %v1318, 4294901760
    %v1320 = vsub.f32 %v1318, %v1319
    %v1321 = vand.u32 %v1320, 4294901760
    %1322 = vmatpush1.msra.mxu0 %v1321
    %1323 = vmatprep.subr.mxu0 0.0
    %v1324 = vand.u32 %v1044, 4294901760
    %v1325 = vsub.f32 %v1044, %v1324
    %v1326 = vand.u32 %v1325, 4294901760
    %v1327 = vsub.f32 %v1325, %v1326
    %v1328 = vand.u32 %v1327, 4294901760
    %1329 = vmatpush1.msra.mxu0 %v1328
    %1330 = vmatprep.subr.mxu0 0.0
    %v1331 = vand.u32 %v1045, 4294901760
    %v1332 = vsub.f32 %v1045, %v1331
    %v1333 = vand.u32 %v1332, 4294901760
    %v1334 = vsub.f32 %v1332, %v1333
    %v1335 = vand.u32 %v1334, 4294901760
    %1336 = vmatpush1.msra.mxu0 %v1335
    %1337 = vmatprep.subr.mxu0 0.0
    %v1338 = vand.u32 %v1046, 4294901760
    %v1339 = vsub.f32 %v1046, %v1338
    %v1340 = vand.u32 %v1339, 4294901760
    %v1341 = vsub.f32 %v1339, %v1340
    %v1342 = vand.u32 %v1341, 4294901760
    %1343 = vmatpush1.msra.mxu0 %v1342
    %1344 = vmatprep.subr.mxu0 0.0
    %v1345 = vand.u32 %v1047, 4294901760
    %v1346 = vsub.f32 %v1047, %v1345
    %v1347 = vand.u32 %v1346, 4294901760
    %v1348 = vsub.f32 %v1346, %v1347
    %v1349 = vand.u32 %v1348, 4294901760
    %1350 = vmatpush1.msra.mxu0 %v1349
    %1351 = vmatprep.subr.mxu0 0.0
    %v1352 = vand.u32 %v1048, 4294901760
    %v1353 = vsub.f32 %v1048, %v1352
    %v1354 = vand.u32 %v1353, 4294901760
    %v1355 = vsub.f32 %v1353, %v1354
    %v1356 = vand.u32 %v1355, 4294901760
    %1357 = vmatpush1.msra.mxu0 %v1356
    %1358 = vmatprep.subr.mxu0 0.0
    %v1359 = vand.u32 %v1049, 4294901760
    %v1360 = vsub.f32 %v1049, %v1359
    %v1361 = vand.u32 %v1360, 4294901760
    %v1362 = vsub.f32 %v1360, %v1361
    %v1363 = vand.u32 %v1362, 4294901760
    %1364 = vmatpush1.msra.mxu0 %v1363
    %1365 = vmatprep.subr.mxu0 0.0
    %v1366 = vand.u32 %v1050, 4294901760
    %v1367 = vsub.f32 %v1050, %v1366
    %v1368 = vand.u32 %v1367, 4294901760
    %v1369 = vsub.f32 %v1367, %v1368
    %v1370 = vand.u32 %v1369, 4294901760
    %1371 = vmatpush1.msra.mxu0 %v1370
    %1372 = vmatprep.subr.mxu0 0.0
    %v1373 = vand.u32 %v1051, 4294901760
    %v1374 = vsub.f32 %v1051, %v1373
    %v1375 = vand.u32 %v1374, 4294901760
    %v1376 = vsub.f32 %v1374, %v1375
    %v1377 = vand.u32 %v1376, 4294901760
    %1378 = vmatpush1.msra.mxu0 %v1377
    %1379 = vmatprep.subr.mxu0 0.0
    %v1380 = vand.u32 %v1052, 4294901760
    %v1381 = vsub.f32 %v1052, %v1380
    %v1382 = vand.u32 %v1381, 4294901760
    %v1383 = vsub.f32 %v1381, %v1382
    %v1384 = vand.u32 %v1383, 4294901760
    %1385 = vmatpush1.msra.mxu0 %v1384
    %1386 = vmatprep.subr.mxu0 0.0
    %v1387 = vand.u32 %v1053, 4294901760
    %v1388 = vsub.f32 %v1053, %v1387
    %v1389 = vand.u32 %v1388, 4294901760
    %v1390 = vsub.f32 %v1388, %v1389
    %v1391 = vand.u32 %v1390, 4294901760
    %1392 = vmatpush1.msra.mxu0 %v1391
    %1393 = vmatprep.subr.mxu0 0.0
    %v1394 = vand.u32 %v1054, 4294901760
    %v1395 = vsub.f32 %v1054, %v1394
    %v1396 = vand.u32 %v1395, 4294901760
    %v1397 = vsub.f32 %v1395, %v1396
    %v1398 = vand.u32 %v1397, 4294901760
    %1399 = vmatpush1.msra.mxu0 %v1398
    %1400 = vmatprep.subr.mxu0 0.0
    %v1401 = vand.u32 %v1055, 4294901760
    %v1402 = vsub.f32 %v1055, %v1401
    %v1403 = vand.u32 %v1402, 4294901760
    %v1404 = vsub.f32 %v1402, %v1403
    %v1405 = vand.u32 %v1404, 4294901760
    %1406 = vmatpush1.msra.mxu0 %v1405
    %v1407 = vand.u32 %v1019, 4294901760
    %1408 = vmatprep.mubr.f32.mxu0 %v1407
    %v1409 = vand.u32 %v1018, 4294901760
    %1410 = vmatmul.mubr.f32.gmra.mrb[0].mxu0 %v1409
    %v1411 = vpop.f32.mrb[0].mxu0
    %v1412 = vadd.f32 %v1165, %v1411
    %v1413 = vpop.f32.mrb[0].mxu0
    %v1414 = vand.u32 %v1021, 4294901760
    %1415 = vmatprep.mubr.f32.mxu0 %v1414
    %v1416 = vand.u32 %v1020, 4294901760
    %1417 = vmatmul.mubr.f32.gmra.mrb[0].mxu0 %v1416
    %v1418 = vpop.f32.mrb[0].mxu0
    %v1419 = vadd.f32 %v1180, %v1418
    %v1420 = vpop.f32.mrb[0].mxu0
    %1421 = vdwg.mxu0
    %1422 = vmatprep.subr.mxu0 0.0
    %v1423 = vand.u32 %v1024, 4294901760
    %v1424 = vsub.f32 %v1024, %v1423
    %1425 = vmatpush1.msra.mxu0 %v1424
    %1426 = vmatprep.subr.mxu0 0.0
    %v1427 = vand.u32 %v1025, 4294901760
    %v1428 = vsub.f32 %v1025, %v1427
    %1429 = vmatpush1.msra.mxu0 %v1428
    %1430 = vmatprep.subr.mxu0 0.0
    %v1431 = vand.u32 %v1026, 4294901760
    %v1432 = vsub.f32 %v1026, %v1431
    %1433 = vmatpush1.msra.mxu0 %v1432
    %1434 = vmatprep.subr.mxu0 0.0
    %v1435 = vand.u32 %v1027, 4294901760
    %v1436 = vsub.f32 %v1027, %v1435
    %1437 = vmatpush1.msra.mxu0 %v1436
    %1438 = vmatprep.subr.mxu0 0.0
    %v1439 = vand.u32 %v1028, 4294901760
    %v1440 = vsub.f32 %v1028, %v1439
    %1441 = vmatpush1.msra.mxu0 %v1440
    %1442 = vmatprep.subr.mxu0 0.0
    %v1443 = vand.u32 %v1029, 4294901760
    %v1444 = vsub.f32 %v1029, %v1443
    %1445 = vmatpush1.msra.mxu0 %v1444
    %1446 = vmatprep.subr.mxu0 0.0
    %v1447 = vand.u32 %v1030, 4294901760
    %v1448 = vsub.f32 %v1030, %v1447
    %1449 = vmatpush1.msra.mxu0 %v1448
    %1450 = vmatprep.subr.mxu0 0.0
    %v1451 = vand.u32 %v1031, 4294901760
    %v1452 = vsub.f32 %v1031, %v1451
    %1453 = vmatpush1.msra.mxu0 %v1452
    %1454 = vmatprep.subr.mxu0 0.0
    %v1455 = vand.u32 %v1032, 4294901760
    %v1456 = vsub.f32 %v1032, %v1455
    %1457 = vmatpush1.msra.mxu0 %v1456
    %1458 = vmatprep.subr.mxu0 0.0
    %v1459 = vand.u32 %v1033, 4294901760
    %v1460 = vsub.f32 %v1033, %v1459
    %1461 = vmatpush1.msra.mxu0 %v1460
    %1462 = vmatprep.subr.mxu0 0.0
    %v1463 = vand.u32 %v1034, 4294901760
    %v1464 = vsub.f32 %v1034, %v1463
    %1465 = vmatpush1.msra.mxu0 %v1464
    %1466 = vmatprep.subr.mxu0 0.0
    %v1467 = vand.u32 %v1035, 4294901760
    %v1468 = vsub.f32 %v1035, %v1467
    %1469 = vmatpush1.msra.mxu0 %v1468
    %1470 = vmatprep.subr.mxu0 0.0
    %v1471 = vand.u32 %v1036, 4294901760
    %v1472 = vsub.f32 %v1036, %v1471
    %1473 = vmatpush1.msra.mxu0 %v1472
    %1474 = vmatprep.subr.mxu0 0.0
    %v1475 = vand.u32 %v1037, 4294901760
    %v1476 = vsub.f32 %v1037, %v1475
    %1477 = vmatpush1.msra.mxu0 %v1476
    %1478 = vmatprep.subr.mxu0 0.0
    %v1479 = vand.u32 %v1038, 4294901760
    %v1480 = vsub.f32 %v1038, %v1479
    %1481 = vmatpush1.msra.mxu0 %v1480
    %1482 = vmatprep.subr.mxu0 0.0
    %v1483 = vand.u32 %v1039, 4294901760
    %v1484 = vsub.f32 %v1039, %v1483
    %1485 = vmatpush1.msra.mxu0 %v1484
    %1486 = vmatprep.subr.mxu0 0.0
    %v1487 = vand.u32 %v1040, 4294901760
    %v1488 = vsub.f32 %v1040, %v1487
    %1489 = vmatpush1.msra.mxu0 %v1488
    %1490 = vmatprep.subr.mxu0 0.0
    %v1491 = vand.u32 %v1041, 4294901760
    %v1492 = vsub.f32 %v1041, %v1491
    %1493 = vmatpush1.msra.mxu0 %v1492
    %1494 = vmatprep.subr.mxu0 0.0
    %v1495 = vand.u32 %v1042, 4294901760
    %v1496 = vsub.f32 %v1042, %v1495
    %1497 = vmatpush1.msra.mxu0 %v1496
    %1498 = vmatprep.subr.mxu0 0.0
    %v1499 = vand.u32 %v1043, 4294901760
    %v1500 = vsub.f32 %v1043, %v1499
    %1501 = vmatpush1.msra.mxu0 %v1500
    %1502 = vmatprep.subr.mxu0 0.0
    %v1503 = vand.u32 %v1044, 4294901760
    %v1504 = vsub.f32 %v1044, %v1503
    %1505 = vmatpush1.msra.mxu0 %v1504
    %1506 = vmatprep.subr.mxu0 0.0
    %v1507 = vand.u32 %v1045, 4294901760
    %v1508 = vsub.f32 %v1045, %v1507
    %1509 = vmatpush1.msra.mxu0 %v1508
    %1510 = vmatprep.subr.mxu0 0.0
    %v1511 = vand.u32 %v1046, 4294901760
    %v1512 = vsub.f32 %v1046, %v1511
    %1513 = vmatpush1.msra.mxu0 %v1512
    %1514 = vmatprep.subr.mxu0 0.0
    %v1515 = vand.u32 %v1047, 4294901760
    %v1516 = vsub.f32 %v1047, %v1515
    %1517 = vmatpush1.msra.mxu0 %v1516
    %1518 = vmatprep.subr.mxu0 0.0
    %v1519 = vand.u32 %v1048, 4294901760
    %v1520 = vsub.f32 %v1048, %v1519
    %1521 = vmatpush1.msra.mxu0 %v1520
    %1522 = vmatprep.subr.mxu0 0.0
    %v1523 = vand.u32 %v1049, 4294901760
    %v1524 = vsub.f32 %v1049, %v1523
    %1525 = vmatpush1.msra.mxu0 %v1524
    %1526 = vmatprep.subr.mxu0 0.0
    %v1527 = vand.u32 %v1050, 4294901760
    %v1528 = vsub.f32 %v1050, %v1527
    %1529 = vmatpush1.msra.mxu0 %v1528
    %1530 = vmatprep.subr.mxu0 0.0
    %v1531 = vand.u32 %v1051, 4294901760
    %v1532 = vsub.f32 %v1051, %v1531
    %1533 = vmatpush1.msra.mxu0 %v1532
    %1534 = vmatprep.subr.mxu0 0.0
    %v1535 = vand.u32 %v1052, 4294901760
    %v1536 = vsub.f32 %v1052, %v1535
    %1537 = vmatpush1.msra.mxu0 %v1536
    %1538 = vmatprep.subr.mxu0 0.0
    %v1539 = vand.u32 %v1053, 4294901760
    %v1540 = vsub.f32 %v1053, %v1539
    %1541 = vmatpush1.msra.mxu0 %v1540
    %1542 = vmatprep.subr.mxu0 0.0
    %v1543 = vand.u32 %v1054, 4294901760
    %v1544 = vsub.f32 %v1054, %v1543
    %1545 = vmatpush1.msra.mxu0 %v1544
    %1546 = vmatprep.subr.mxu0 0.0
    %v1547 = vand.u32 %v1055, 4294901760
    %v1548 = vsub.f32 %v1055, %v1547
    %1549 = vmatpush1.msra.mxu0 %v1548
    %v1550 = vand.u32 %v1019, 4294901760
    %v1551 = vsub.f32 %v1019, %v1550
    %1552 = vmatprep.mubr.f32.mxu0 %v1551
    %v1553 = vand.u32 %v1018, 4294901760
    %v1554 = vsub.f32 %v1018, %v1553
    %1555 = vmatmul.mubr.f32.gmra.mrb[0].mxu0 %v1554
    %v1556 = vpop.f32.mrb[0].mxu0
    %v1557 = vadd.f32 %v1412, %v1556
    %v1558 = vpop.f32.mrb[0].mxu0
    %v1559 = vand.u32 %v1021, 4294901760
    %v1560 = vsub.f32 %v1021, %v1559
    %1561 = vmatprep.mubr.f32.mxu0 %v1560
    %v1562 = vand.u32 %v1020, 4294901760
    %v1563 = vsub.f32 %v1020, %v1562
    %1564 = vmatmul.mubr.f32.gmra.mrb[0].mxu0 %v1563
    %v1565 = vpop.f32.mrb[0].mxu0
    %v1566 = vadd.f32 %v1419, %v1565
    %v1567 = vpop.f32.mrb[0].mxu0
    %1568 = vdwg.mxu0
    %1569 = vmatprep.subr.mxu0 0.0
    %v1570 = vand.u32 %v1024, 4294901760
    %1571 = vmatpush1.msra.mxu0 %v1570
    %1572 = vmatprep.subr.mxu0 0.0
    %v1573 = vand.u32 %v1025, 4294901760
    %1574 = vmatpush1.msra.mxu0 %v1573
    %1575 = vmatprep.subr.mxu0 0.0
    %v1576 = vand.u32 %v1026, 4294901760
    %1577 = vmatpush1.msra.mxu0 %v1576
    %1578 = vmatprep.subr.mxu0 0.0
    %v1579 = vand.u32 %v1027, 4294901760
    %1580 = vmatpush1.msra.mxu0 %v1579
    %1581 = vmatprep.subr.mxu0 0.0
    %v1582 = vand.u32 %v1028, 4294901760
    %1583 = vmatpush1.msra.mxu0 %v1582
    %1584 = vmatprep.subr.mxu0 0.0
    %v1585 = vand.u32 %v1029, 4294901760
    %1586 = vmatpush1.msra.mxu0 %v1585
    %1587 = vmatprep.subr.mxu0 0.0
    %v1588 = vand.u32 %v1030, 4294901760
    %1589 = vmatpush1.msra.mxu0 %v1588
    %1590 = vmatprep.subr.mxu0 0.0
    %v1591 = vand.u32 %v1031, 4294901760
    %1592 = vmatpush1.msra.mxu0 %v1591
    %1593 = vmatprep.subr.mxu0 0.0
    %v1594 = vand.u32 %v1032, 4294901760
    %1595 = vmatpush1.msra.mxu0 %v1594
    %1596 = vmatprep.subr.mxu0 0.0
    %v1597 = vand.u32 %v1033, 4294901760
    %1598 = vmatpush1.msra.mxu0 %v1597
    %1599 = vmatprep.subr.mxu0 0.0
    %v1600 = vand.u32 %v1034, 4294901760
    %1601 = vmatpush1.msra.mxu0 %v1600
    %1602 = vmatprep.subr.mxu0 0.0
    %v1603 = vand.u32 %v1035, 4294901760
    %1604 = vmatpush1.msra.mxu0 %v1603
    %1605 = vmatprep.subr.mxu0 0.0
    %v1606 = vand.u32 %v1036, 4294901760
    %1607 = vmatpush1.msra.mxu0 %v1606
    %1608 = vmatprep.subr.mxu0 0.0
    %v1609 = vand.u32 %v1037, 4294901760
    %1610 = vmatpush1.msra.mxu0 %v1609
    %1611 = vmatprep.subr.mxu0 0.0
    %v1612 = vand.u32 %v1038, 4294901760
    %1613 = vmatpush1.msra.mxu0 %v1612
    %1614 = vmatprep.subr.mxu0 0.0
    %v1615 = vand.u32 %v1039, 4294901760
    %1616 = vmatpush1.msra.mxu0 %v1615
    %1617 = vmatprep.subr.mxu0 0.0
    %v1618 = vand.u32 %v1040, 4294901760
    %1619 = vmatpush1.msra.mxu0 %v1618
    %1620 = vmatprep.subr.mxu0 0.0
    %v1621 = vand.u32 %v1041, 4294901760
    %1622 = vmatpush1.msra.mxu0 %v1621
    %1623 = vmatprep.subr.mxu0 0.0
    %v1624 = vand.u32 %v1042, 4294901760
    %1625 = vmatpush1.msra.mxu0 %v1624
    %1626 = vmatprep.subr.mxu0 0.0
    %v1627 = vand.u32 %v1043, 4294901760
    %1628 = vmatpush1.msra.mxu0 %v1627
    %1629 = vmatprep.subr.mxu0 0.0
    %v1630 = vand.u32 %v1044, 4294901760
    %1631 = vmatpush1.msra.mxu0 %v1630
    %1632 = vmatprep.subr.mxu0 0.0
    %v1633 = vand.u32 %v1045, 4294901760
    %1634 = vmatpush1.msra.mxu0 %v1633
    %1635 = vmatprep.subr.mxu0 0.0
    %v1636 = vand.u32 %v1046, 4294901760
    %1637 = vmatpush1.msra.mxu0 %v1636
    %1638 = vmatprep.subr.mxu0 0.0
    %v1639 = vand.u32 %v1047, 4294901760
    %1640 = vmatpush1.msra.mxu0 %v1639
    %1641 = vmatprep.subr.mxu0 0.0
    %v1642 = vand.u32 %v1048, 4294901760
    %1643 = vmatpush1.msra.mxu0 %v1642
    %1644 = vmatprep.subr.mxu0 0.0
    %v1645 = vand.u32 %v1049, 4294901760
    %1646 = vmatpush1.msra.mxu0 %v1645
    %1647 = vmatprep.subr.mxu0 0.0
    %v1648 = vand.u32 %v1050, 4294901760
    %1649 = vmatpush1.msra.mxu0 %v1648
    %1650 = vmatprep.subr.mxu0 0.0
    %v1651 = vand.u32 %v1051, 4294901760
    %1652 = vmatpush1.msra.mxu0 %v1651
    %1653 = vmatprep.subr.mxu0 0.0
    %v1654 = vand.u32 %v1052, 4294901760
    %1655 = vmatpush1.msra.mxu0 %v1654
    %1656 = vmatprep.subr.mxu0 0.0
    %v1657 = vand.u32 %v1053, 4294901760
    %1658 = vmatpush1.msra.mxu0 %v1657
    %1659 = vmatprep.subr.mxu0 0.0
    %v1660 = vand.u32 %v1054, 4294901760
    %1661 = vmatpush1.msra.mxu0 %v1660
    %1662 = vmatprep.subr.mxu0 0.0
    %v1663 = vand.u32 %v1055, 4294901760
    %1664 = vmatpush1.msra.mxu0 %v1663
    %v1665 = vand.u32 %v1019, 4294901760
    %v1666 = vsub.f32 %v1019, %v1665
    %v1667 = vand.u32 %v1666, 4294901760
    %1668 = vmatprep.mubr.f32.mxu0 %v1667
    %v1669 = vand.u32 %v1018, 4294901760
    %v1670 = vsub.f32 %v1018, %v1669
    %v1671 = vand.u32 %v1670, 4294901760
    %1672 = vmatmul.mubr.f32.gmra.mrb[0].mxu0 %v1671
    %v1673 = vpop.f32.mrb[0].mxu0
    %v1674 = vadd.f32 %v1557, %v1673
    %v1675 = vpop.f32.mrb[0].mxu0
    %v1676 = vand.u32 %v1021, 4294901760
    %v1677 = vsub.f32 %v1021, %v1676
    %v1678 = vand.u32 %v1677, 4294901760
    %1679 = vmatprep.mubr.f32.mxu0 %v1678
    %v1680 = vand.u32 %v1020, 4294901760
    %v1681 = vsub.f32 %v1020, %v1680
    %v1682 = vand.u32 %v1681, 4294901760
    %1683 = vmatmul.mubr.f32.gmra.mrb[0].mxu0 %v1682
    %v1684 = vpop.f32.mrb[0].mxu0
    %v1685 = vadd.f32 %v1566, %v1684
    %v1686 = vpop.f32.mrb[0].mxu0
    %1687 = vdwg.mxu0
    %1688 = vmatprep.subr.mxu0 0.0
    %v1689 = vand.u32 %v1024, 4294901760
    %v1690 = vsub.f32 %v1024, %v1689
    %v1691 = vand.u32 %v1690, 4294901760
    %1692 = vmatpush1.msra.mxu0 %v1691
    %1693 = vmatprep.subr.mxu0 0.0
    %v1694 = vand.u32 %v1025, 4294901760
    %v1695 = vsub.f32 %v1025, %v1694
    %v1696 = vand.u32 %v1695, 4294901760
    %1697 = vmatpush1.msra.mxu0 %v1696
    %1698 = vmatprep.subr.mxu0 0.0
    %v1699 = vand.u32 %v1026, 4294901760
    %v1700 = vsub.f32 %v1026, %v1699
    %v1701 = vand.u32 %v1700, 4294901760
    %1702 = vmatpush1.msra.mxu0 %v1701
    %1703 = vmatprep.subr.mxu0 0.0
    %v1704 = vand.u32 %v1027, 4294901760
    %v1705 = vsub.f32 %v1027, %v1704
    %v1706 = vand.u32 %v1705, 4294901760
    %1707 = vmatpush1.msra.mxu0 %v1706
    %1708 = vmatprep.subr.mxu0 0.0
    %v1709 = vand.u32 %v1028, 4294901760
    %v1710 = vsub.f32 %v1028, %v1709
    %v1711 = vand.u32 %v1710, 4294901760
    %1712 = vmatpush1.msra.mxu0 %v1711
    %1713 = vmatprep.subr.mxu0 0.0
    %v1714 = vand.u32 %v1029, 4294901760
    %v1715 = vsub.f32 %v1029, %v1714
    %v1716 = vand.u32 %v1715, 4294901760
    %1717 = vmatpush1.msra.mxu0 %v1716
    %1718 = vmatprep.subr.mxu0 0.0
    %v1719 = vand.u32 %v1030, 4294901760
    %v1720 = vsub.f32 %v1030, %v1719
    %v1721 = vand.u32 %v1720, 4294901760
    %1722 = vmatpush1.msra.mxu0 %v1721
    %1723 = vmatprep.subr.mxu0 0.0
    %v1724 = vand.u32 %v1031, 4294901760
    %v1725 = vsub.f32 %v1031, %v1724
    %v1726 = vand.u32 %v1725, 4294901760
    %1727 = vmatpush1.msra.mxu0 %v1726
    %1728 = vmatprep.subr.mxu0 0.0
    %v1729 = vand.u32 %v1032, 4294901760
    %v1730 = vsub.f32 %v1032, %v1729
    %v1731 = vand.u32 %v1730, 4294901760
    %1732 = vmatpush1.msra.mxu0 %v1731
    %1733 = vmatprep.subr.mxu0 0.0
    %v1734 = vand.u32 %v1033, 4294901760
    %v1735 = vsub.f32 %v1033, %v1734
    %v1736 = vand.u32 %v1735, 4294901760
    %1737 = vmatpush1.msra.mxu0 %v1736
    %1738 = vmatprep.subr.mxu0 0.0
    %v1739 = vand.u32 %v1034, 4294901760
    %v1740 = vsub.f32 %v1034, %v1739
    %v1741 = vand.u32 %v1740, 4294901760
    %1742 = vmatpush1.msra.mxu0 %v1741
    %1743 = vmatprep.subr.mxu0 0.0
    %v1744 = vand.u32 %v1035, 4294901760
    %v1745 = vsub.f32 %v1035, %v1744
    %v1746 = vand.u32 %v1745, 4294901760
    %1747 = vmatpush1.msra.mxu0 %v1746
    %1748 = vmatprep.subr.mxu0 0.0
    %v1749 = vand.u32 %v1036, 4294901760
    %v1750 = vsub.f32 %v1036, %v1749
    %v1751 = vand.u32 %v1750, 4294901760
    %1752 = vmatpush1.msra.mxu0 %v1751
    %1753 = vmatprep.subr.mxu0 0.0
    %v1754 = vand.u32 %v1037, 4294901760
    %v1755 = vsub.f32 %v1037, %v1754
    %v1756 = vand.u32 %v1755, 4294901760
    %1757 = vmatpush1.msra.mxu0 %v1756
    %1758 = vmatprep.subr.mxu0 0.0
    %v1759 = vand.u32 %v1038, 4294901760
    %v1760 = vsub.f32 %v1038, %v1759
    %v1761 = vand.u32 %v1760, 4294901760
    %1762 = vmatpush1.msra.mxu0 %v1761
    %1763 = vmatprep.subr.mxu0 0.0
    %v1764 = vand.u32 %v1039, 4294901760
    %v1765 = vsub.f32 %v1039, %v1764
    %v1766 = vand.u32 %v1765, 4294901760
    %1767 = vmatpush1.msra.mxu0 %v1766
    %1768 = vmatprep.subr.mxu0 0.0
    %v1769 = vand.u32 %v1040, 4294901760
    %v1770 = vsub.f32 %v1040, %v1769
    %v1771 = vand.u32 %v1770, 4294901760
    %1772 = vmatpush1.msra.mxu0 %v1771
    %1773 = vmatprep.subr.mxu0 0.0
    %v1774 = vand.u32 %v1041, 4294901760
    %v1775 = vsub.f32 %v1041, %v1774
    %v1776 = vand.u32 %v1775, 4294901760
    %1777 = vmatpush1.msra.mxu0 %v1776
    %1778 = vmatprep.subr.mxu0 0.0
    %v1779 = vand.u32 %v1042, 4294901760
    %v1780 = vsub.f32 %v1042, %v1779
    %v1781 = vand.u32 %v1780, 4294901760
    %1782 = vmatpush1.msra.mxu0 %v1781
    %1783 = vmatprep.subr.mxu0 0.0
    %v1784 = vand.u32 %v1043, 4294901760
    %v1785 = vsub.f32 %v1043, %v1784
    %v1786 = vand.u32 %v1785, 4294901760
    %1787 = vmatpush1.msra.mxu0 %v1786
    %1788 = vmatprep.subr.mxu0 0.0
    %v1789 = vand.u32 %v1044, 4294901760
    %v1790 = vsub.f32 %v1044, %v1789
    %v1791 = vand.u32 %v1790, 4294901760
    %1792 = vmatpush1.msra.mxu0 %v1791
    %1793 = vmatprep.subr.mxu0 0.0
    %v1794 = vand.u32 %v1045, 4294901760
    %v1795 = vsub.f32 %v1045, %v1794
    %v1796 = vand.u32 %v1795, 4294901760
    %1797 = vmatpush1.msra.mxu0 %v1796
    %1798 = vmatprep.subr.mxu0 0.0
    %v1799 = vand.u32 %v1046, 4294901760
    %v1800 = vsub.f32 %v1046, %v1799
    %v1801 = vand.u32 %v1800, 4294901760
    %1802 = vmatpush1.msra.mxu0 %v1801
    %1803 = vmatprep.subr.mxu0 0.0
    %v1804 = vand.u32 %v1047, 4294901760
    %v1805 = vsub.f32 %v1047, %v1804
    %v1806 = vand.u32 %v1805, 4294901760
    %1807 = vmatpush1.msra.mxu0 %v1806
    %1808 = vmatprep.subr.mxu0 0.0
    %v1809 = vand.u32 %v1048, 4294901760
    %v1810 = vsub.f32 %v1048, %v1809
    %v1811 = vand.u32 %v1810, 4294901760
    %1812 = vmatpush1.msra.mxu0 %v1811
    %1813 = vmatprep.subr.mxu0 0.0
    %v1814 = vand.u32 %v1049, 4294901760
    %v1815 = vsub.f32 %v1049, %v1814
    %v1816 = vand.u32 %v1815, 4294901760
    %1817 = vmatpush1.msra.mxu0 %v1816
    %1818 = vmatprep.subr.mxu0 0.0
    %v1819 = vand.u32 %v1050, 4294901760
    %v1820 = vsub.f32 %v1050, %v1819
    %v1821 = vand.u32 %v1820, 4294901760
    %1822 = vmatpush1.msra.mxu0 %v1821
    %1823 = vmatprep.subr.mxu0 0.0
    %v1824 = vand.u32 %v1051, 4294901760
    %v1825 = vsub.f32 %v1051, %v1824
    %v1826 = vand.u32 %v1825, 4294901760
    %1827 = vmatpush1.msra.mxu0 %v1826
    %1828 = vmatprep.subr.mxu0 0.0
    %v1829 = vand.u32 %v1052, 4294901760
    %v1830 = vsub.f32 %v1052, %v1829
    %v1831 = vand.u32 %v1830, 4294901760
    %1832 = vmatpush1.msra.mxu0 %v1831
    %1833 = vmatprep.subr.mxu0 0.0
    %v1834 = vand.u32 %v1053, 4294901760
    %v1835 = vsub.f32 %v1053, %v1834
    %v1836 = vand.u32 %v1835, 4294901760
    %1837 = vmatpush1.msra.mxu0 %v1836
    %1838 = vmatprep.subr.mxu0 0.0
    %v1839 = vand.u32 %v1054, 4294901760
    %v1840 = vsub.f32 %v1054, %v1839
    %v1841 = vand.u32 %v1840, 4294901760
    %1842 = vmatpush1.msra.mxu0 %v1841
    %1843 = vmatprep.subr.mxu0 0.0
    %v1844 = vand.u32 %v1055, 4294901760
    %v1845 = vsub.f32 %v1055, %v1844
    %v1846 = vand.u32 %v1845, 4294901760
    %1847 = vmatpush1.msra.mxu0 %v1846
    %v1848 = vand.u32 %v1019, 4294901760
    %1849 = vmatprep.mubr.f32.mxu0 %v1848
    %v1850 = vand.u32 %v1018, 4294901760
    %1851 = vmatmul.mubr.f32.gmra.mrb[0].mxu0 %v1850
    %v1852 = vpop.f32.mrb[0].mxu0
    %v1853 = vadd.f32 %v1674, %v1852
    %v1854 = vpop.f32.mrb[0].mxu0
    %v1855 = vand.u32 %v1021, 4294901760
    %1856 = vmatprep.mubr.f32.mxu0 %v1855
    %v1857 = vand.u32 %v1020, 4294901760
    %1858 = vmatmul.mubr.f32.gmra.mrb[0].mxu0 %v1857
    %v1859 = vpop.f32.mrb[0].mxu0
    %v1860 = vadd.f32 %v1685, %v1859
    %v1861 = vpop.f32.mrb[0].mxu0
    %1862 = vdwg.mxu0
    %1863 = vmatprep.subr.mxu0 0.0
    %v1864 = vand.u32 %v1024, 4294901760
    %1865 = vmatpush1.msra.mxu0 %v1864
    %1866 = vmatprep.subr.mxu0 0.0
    %v1867 = vand.u32 %v1025, 4294901760
    %1868 = vmatpush1.msra.mxu0 %v1867
    %1869 = vmatprep.subr.mxu0 0.0
    %v1870 = vand.u32 %v1026, 4294901760
    %1871 = vmatpush1.msra.mxu0 %v1870
    %1872 = vmatprep.subr.mxu0 0.0
    %v1873 = vand.u32 %v1027, 4294901760
    %1874 = vmatpush1.msra.mxu0 %v1873
    %1875 = vmatprep.subr.mxu0 0.0
    %v1876 = vand.u32 %v1028, 4294901760
    %1877 = vmatpush1.msra.mxu0 %v1876
    %1878 = vmatprep.subr.mxu0 0.0
    %v1879 = vand.u32 %v1029, 4294901760
    %1880 = vmatpush1.msra.mxu0 %v1879
    %1881 = vmatprep.subr.mxu0 0.0
    %v1882 = vand.u32 %v1030, 4294901760
    %1883 = vmatpush1.msra.mxu0 %v1882
    %1884 = vmatprep.subr.mxu0 0.0
    %v1885 = vand.u32 %v1031, 4294901760
    %1886 = vmatpush1.msra.mxu0 %v1885
    %1887 = vmatprep.subr.mxu0 0.0
    %v1888 = vand.u32 %v1032, 4294901760
    %1889 = vmatpush1.msra.mxu0 %v1888
    %1890 = vmatprep.subr.mxu0 0.0
    %v1891 = vand.u32 %v1033, 4294901760
    %1892 = vmatpush1.msra.mxu0 %v1891
    %1893 = vmatprep.subr.mxu0 0.0
    %v1894 = vand.u32 %v1034, 4294901760
    %1895 = vmatpush1.msra.mxu0 %v1894
    %1896 = vmatprep.subr.mxu0 0.0
    %v1897 = vand.u32 %v1035, 4294901760
    %1898 = vmatpush1.msra.mxu0 %v1897
    %1899 = vmatprep.subr.mxu0 0.0
    %v1900 = vand.u32 %v1036, 4294901760
    %1901 = vmatpush1.msra.mxu0 %v1900
    %1902 = vmatprep.subr.mxu0 0.0
    %v1903 = vand.u32 %v1037, 4294901760
    %1904 = vmatpush1.msra.mxu0 %v1903
    %1905 = vmatprep.subr.mxu0 0.0
    %v1906 = vand.u32 %v1038, 4294901760
    %1907 = vmatpush1.msra.mxu0 %v1906
    %1908 = vmatprep.subr.mxu0 0.0
    %v1909 = vand.u32 %v1039, 4294901760
    %1910 = vmatpush1.msra.mxu0 %v1909
    %1911 = vmatprep.subr.mxu0 0.0
    %v1912 = vand.u32 %v1040, 4294901760
    %1913 = vmatpush1.msra.mxu0 %v1912
    %1914 = vmatprep.subr.mxu0 0.0
    %v1915 = vand.u32 %v1041, 4294901760
    %1916 = vmatpush1.msra.mxu0 %v1915
    %1917 = vmatprep.subr.mxu0 0.0
    %v1918 = vand.u32 %v1042, 4294901760
    %1919 = vmatpush1.msra.mxu0 %v1918
    %1920 = vmatprep.subr.mxu0 0.0
    %v1921 = vand.u32 %v1043, 4294901760
    %1922 = vmatpush1.msra.mxu0 %v1921
    %1923 = vmatprep.subr.mxu0 0.0
    %v1924 = vand.u32 %v1044, 4294901760
    %1925 = vmatpush1.msra.mxu0 %v1924
    %1926 = vmatprep.subr.mxu0 0.0
    %v1927 = vand.u32 %v1045, 4294901760
    %1928 = vmatpush1.msra.mxu0 %v1927
    %1929 = vmatprep.subr.mxu0 0.0
    %v1930 = vand.u32 %v1046, 4294901760
    %1931 = vmatpush1.msra.mxu0 %v1930
    %1932 = vmatprep.subr.mxu0 0.0
    %v1933 = vand.u32 %v1047, 4294901760
    %1934 = vmatpush1.msra.mxu0 %v1933
    %1935 = vmatprep.subr.mxu0 0.0
    %v1936 = vand.u32 %v1048, 4294901760
    %1937 = vmatpush1.msra.mxu0 %v1936
    %1938 = vmatprep.subr.mxu0 0.0
    %v1939 = vand.u32 %v1049, 4294901760
    %1940 = vmatpush1.msra.mxu0 %v1939
    %1941 = vmatprep.subr.mxu0 0.0
    %v1942 = vand.u32 %v1050, 4294901760
    %1943 = vmatpush1.msra.mxu0 %v1942
    %1944 = vmatprep.subr.mxu0 0.0
    %v1945 = vand.u32 %v1051, 4294901760
    %1946 = vmatpush1.msra.mxu0 %v1945
    %1947 = vmatprep.subr.mxu0 0.0
    %v1948 = vand.u32 %v1052, 4294901760
    %1949 = vmatpush1.msra.mxu0 %v1948
    %1950 = vmatprep.subr.mxu0 0.0
    %v1951 = vand.u32 %v1053, 4294901760
    %1952 = vmatpush1.msra.mxu0 %v1951
    %1953 = vmatprep.subr.mxu0 0.0
    %v1954 = vand.u32 %v1054, 4294901760
    %1955 = vmatpush1.msra.mxu0 %v1954
    %1956 = vmatprep.subr.mxu0 0.0
    %v1957 = vand.u32 %v1055, 4294901760
    %1958 = vmatpush1.msra.mxu0 %v1957
    %v1959 = vand.u32 %v1019, 4294901760
    %1960 = vmatprep.mubr.f32.mxu0 %v1959
    %v1961 = vand.u32 %v1018, 4294901760
    %1962 = vmatmul.mubr.f32.gmra.mrb[0].mxu0 %v1961
    %v1963 = vpop.f32.mrb[0].mxu0
    %v1964 = vadd.f32 %v1853, %v1963
    %v1965 = vpop.f32.mrb[0].mxu0
    %v1966 = vand.u32 %v1021, 4294901760
    %1967 = vmatprep.mubr.f32.mxu0 %v1966
    %v1968 = vand.u32 %v1020, 4294901760
    %1969 = vmatmul.mubr.f32.gmra.mrb[0].mxu0 %v1968
    %v1970 = vpop.f32.mrb[0].mxu0
    %v1971 = vadd.f32 %v1860, %v1970
    %v1972 = vpop.f32.mrb[0].mxu0
    %1973 = vdwg.mxu0
    %v1974 = vadd.f32 %v1022, %v1964
    %v1975 = vadd.f32 %v1023, %v1971
    %1976 = vst [vmem:[#allocation2] sm:$0xff] %v1974
    %1977 = vst [vmem:[#allocation2 + $0x8] sm:$0xff] %v1975
    // Predicated region
    $region38: #{tpu_custom_call.1} parent=1 // pred_check
      %p1978 = pneg %p62
    $region39: #{tpu_custom_call.1} parent=1 // pred_check_branch
      %1980 = sbr.rel (%p1978) target = $region41
    $region40: #{tpu_custom_call.1} parent=1 // pred_region
      %v1981 = vld [vmem:[#allocation2] sm:$0xff]
      %v1982 = vld [vmem:[#allocation2 + $0x8] sm:$0xff]
      %v1983 = vld [vmem:[%s4] sm:$0x1]
      %v1985 = vlaneseq
      %v1986 = vshrl.u32 %v1985, 7
      %v1987 = vsub.s32 0, %v1986
      %v1988 = vrot.slane %v1983, %v1987
      %v1990 = vadd.f32 %v1981, %v1988
      %v1991 = vadd.f32 %v1982, %v1988
      %1992 = vst [vmem:[#allocation9] sm:$0xff] %v1990
      %1993 = vst [vmem:[#allocation9 + $0x8] sm:$0xff] %v1991
    $region41: #{tpu_custom_call.1} parent=1 // pred_fallthru
      _
    // Predicated region
    $region42: #{tpu_custom_call.1} parent=1 // pred_check
      _
    $region43: #{tpu_custom_call.1} parent=1 // pred_check_branch
      %1995 = sbr.rel (0) target = $region45
    $region44: #{tpu_custom_call.1} parent=1 // pred_region
      %s1997 = ssub.s32 256, 256
      %1998 = vsyncadd [#allocation5], %s1997
      %s1999 = sshll.u32 [#allocation9], 4
      %s2000 = int_to_ptr.vmem [resolvable:$true] %s1999
      %2005 = dma.vmem_to_hbm [thread:$0]  %s2000, 256, %s5, [#allocation5], 128, 128, 8
    $region45: #{tpu_custom_call.1} parent=1 // pred_fallthru
      _
    // Predicated region
    $region46: #{tpu_custom_call.1} parent=1 // pred_check
      _
    $region47: #{tpu_custom_call.1} parent=1 // pred_check_branch
      %2007 = sbr.rel (0) target = $region49
    $region48: #{tpu_custom_call.1} parent=1 // pred_region
      %2008 = dma.done [#allocation5], 256
    $region49: #{tpu_custom_call.1} parent=1 // pred_fallthru
      _
    %2009 = vsyncpa [#allocation4], 1
    %2010 = vsyncpa [#allocation7], 1
    %2011 = vsyncpa [#allocation5], 1

</llo_original>
